<compile_context>
chip_gen: v7x
topology: tpu7x:2x2x1
jax: 0.10.0
libtpu: 0.0.40
codegen_flags: <defaults>
</compile_context>

<pallas_src>
import functools

import jax
import jax.numpy as jnp
from jax.experimental import pallas as pl
from jax.experimental.pallas import tpu as pltpu


# ----------------------------------------------------------------------------
# One-time capability probes (cached).  If a feature is unsupported (or has
# unexpected semantics) on the installed jax/libtpu, we fall back to the
# previous known-good formulation instead of failing to compile.
# ----------------------------------------------------------------------------
_LANE_STRIDE_OK = None
_ROLL_OK = None


def _probe_lane_stride():
    """Lane-stride-2 loads from a VMEM ref (the in-kernel even/odd split)."""
    def k(x_ref, e_ref, o_ref):
        e_ref[...] = x_ref[0, :, pl.ds(0, 128, stride=2)]
        o_ref[...] = x_ref[0, :, pl.ds(1, 128, stride=2)]

    try:
        x = jnp.arange(8 * 256, dtype=jnp.float32).reshape(1, 8, 256)
        e, o = pl.pallas_call(
            k,
            out_shape=(jax.ShapeDtypeStruct((8, 128), jnp.float32),
                       jax.ShapeDtypeStruct((8, 128), jnp.float32)),
        )(x)
        return bool(jnp.array_equal(e, x[0, :, 0::2])) and \
               bool(jnp.array_equal(o, x[0, :, 1::2]))
    except Exception:
        return False


def _probe_roll():
    """pltpu.roll(x, 1, axis=1) must match jnp.roll semantics."""
    def k(x_ref, o_ref):
        o_ref[...] = pltpu.roll(x_ref[...], shift=1, axis=1)

    try:
        x = jax.lax.broadcasted_iota(jnp.float32, (8, 128), 1)
        got = pl.pallas_call(
            k, out_shape=jax.ShapeDtypeStruct((8, 128), jnp.float32))(x)
        return bool(jnp.array_equal(got, jnp.roll(x, 1, axis=1)))
    except Exception:
        return False


def _lane_stride_ok():
    global _LANE_STRIDE_OK
    if _LANE_STRIDE_OK is None:
        _LANE_STRIDE_OK = _probe_lane_stride()
    return _LANE_STRIDE_OK


def _roll_ok():
    global _ROLL_OK
    if _ROLL_OK is None:
        _ROLL_OK = _probe_roll()
    return _ROLL_OK


# ----------------------------------------------------------------------------
# Small helpers
# ----------------------------------------------------------------------------
def _vmem_capacity_bytes():
    try:
        info = pltpu.get_tpu_info()
        cap = getattr(info, "vmem_capacity_bytes", None)
        if cap:
            return int(cap)
    except Exception:
        pass
    return 128 * 2**20          # v5e/v6e default


def _pick_time_tile(t_out, cap):
    """Largest 128-multiple tile that balances tail waste vs. per-step overhead."""
    cap = max(128, min(cap, (t_out // 128) * 128))
    best_tt, best_cost = 128, None
    for tt in range(128, cap + 1, 128):
        n = pl.cdiv(t_out, tt)
        cost = n * tt + 64 * n      # covered lanes + fixed grid-step overhead
        if best_cost is None or cost <= best_cost:
            best_tt, best_cost = tt, cost
    return best_tt


def _resident_spec(shape, single_buffer):
    """Constant-index resident operand; single-buffer it when large (v7x VMEM)."""
    n = len(shape)
    index_map = lambda b, j: (0,) * n
    if single_buffer:
        try:
            return pl.BlockSpec(shape, index_map, pipeline_mode=pl.Buffered(1))
        except Exception:
            pass  # older jax without pipeline_mode: default double buffering
    return pl.BlockSpec(shape, index_map)


# ----------------------------------------------------------------------------
# Kernel
# ----------------------------------------------------------------------------
def _down1d_kernel(x_ref, w_ref, b_ref, o_ref, carry_ref, *,
                   tt, split_in_kernel, mask_from, use_roll, precision):
    # x_ref : split_in_kernel -> (1, C, 2*tt) raw input block (even/odd interleaved)
    #         else            -> (1, 2C, tt)  pre-split block [x[2t] ; x[2t+1]]
    # w_ref : (3, C, C) taps (k=0 -> x[2t-1], k=1 -> x[2t], k=2 -> x[2t+1]), resident
    # b_ref : (C, 1) f32 bias, resident
    # o_ref : (1, C, tt)
    # carry_ref : (C, 1) last odd column of the previous time tile of this batch
    C = o_ref.shape[1]
    j = pl.program_id(1)

    # The carried column requires the time axis (grid axis 1) to execute
    # sequentially on one core ("arbitrary" semantics).  Do not reorder the grid.
    @pl.when(j == 0)
    def _():
        carry_ref[...] = jnp.zeros_like(carry_ref)      # conv left pad: x[-1] == 0

    if split_in_kernel:
        even = x_ref[0, :, pl.ds(0, tt, stride=2)]       # x[2t]
        odd = x_ref[0, :, pl.ds(1, tt, stride=2)]        # x[2t+1]
    else:
        z = x_ref[0]                                     # (2C, tt)
        even = z[:C, :]
        odd = z[C:, :]

    if mask_from is not None:
        # Conv right pad: zero odd-phase lanes that fall past the end of x.
        lane = jax.lax.broadcasted_iota(jnp.int32, odd.shape, 1)
        odd = jnp.where(j * tt + lane < mask_from, odd, jnp.zeros_like(odd))

    # x[2t-1]: odd phase shifted one output step to the right; lane 0 comes from
    # the previous tile's last odd column (zero at t == 0 == left pad).
    carry = carry_ref[...].astype(odd.dtype)
    if use_roll:
        lane0 = jax.lax.broadcasted_iota(jnp.int32, odd.shape, 1) == 0
        odd_prev = jnp.where(lane0, carry, pltpu.roll(odd, shift=1, axis=1))
    else:
        odd_prev = jnp.concatenate([carry, odd[:, :tt - 1]], axis=1)

    acc = jnp.dot(w_ref[1], even, preferred_element_type=jnp.float32,
                  precision=precision)
    acc = acc + jnp.dot(w_ref[2], odd, preferred_element_type=jnp.float32,
                        precision=precision)
    acc = acc + jnp.dot(w_ref[0], odd_prev, preferred_element_type=jnp.float32,
                        precision=precision)
    acc = acc + b_ref[...]                               # f32 bias broadcast

    o_ref[0] = acc.astype(o_ref.dtype)
    carry_ref[...] = odd[:, tt - 1:tt].astype(carry_ref.dtype)


# ----------------------------------------------------------------------------
# Wrapper
# ----------------------------------------------------------------------------
def downsample1d(x, weight, bias, *, time_tile=None, compute_dtype=None):
    """Conv1d(dim, dim, kernel_size=3, stride=2, padding=1), NCT layout.

    x: (B, C, T).  weight: (C, C, 3) (PyTorch OIK).  bias: (C,).
    time_tile: optional upper bound (in output samples) on the time tile.
    compute_dtype: dtype for the matmul inputs.  Defaults to x.dtype.
      jnp.bfloat16 is recommended on v6e/v7x when exact f32 parity is not
      required (accumulation and the bias add stay f32).  Note: if x is not
      already in compute_dtype the cast costs one extra HBM pass.
    """
    B, C, T = x.shape
    assert weight.shape == (C, C, 3) and bias.shape == (C,)
    out_dtype = x.dtype
    cdt = jnp.dtype(compute_dtype) if compute_dtype is not None else jnp.dtype(x.dtype)
    bpe_in = cdt.itemsize
    bpe_out = jnp.dtype(out_dtype).itemsize
    T_out = (T - 1) // 2 + 1                             # == ceil(T / 2)

    # Full f32 MXU precision when computing in f32 (parity with PyTorch f32 conv).
    precision = jax.lax.Precision.HIGHEST if cdt == jnp.float32 else None

    # ---- generation-aware VMEM budget (v7x cores only have 64 MiB) ----------
    small_vmem = _vmem_capacity_bytes() <= 64 * 2**20
    io_budget = (14 if small_vmem else 24) * 2**20       # double-buffered IO tiles
    limit_cap = (48 if small_vmem else 100) * 2**20

    # ---- time tiling --------------------------------------------------------
    # (Double buffered) input+output bytes per output lane; same for both layouts.
    per_lane = 4 * C * bpe_in + 2 * C * bpe_out
    max_tt = max(128, min(2048, (int(io_budget) // per_lane) // 128 * 128))
    if time_tile is not None:
        max_tt = max(128, (int(time_tile) // 128) * 128)

    want_split = _lane_stride_ok()        # in-kernel de-interleave (no extra HBM pass)
    single_tile = T_out <= max_tt         # one full-extent tile: no mask, no tail
    if single_tile and want_split and (T % 2 == 1) and T_out >= 128:
        single_tile = False               # tiled + mask avoids a full pad copy of x

    if single_tile:
        tt, n_tiles = T_out, 1
    else:
        tt = _pick_time_tile(T_out, max_tt)
        n_tiles = pl.cdiv(T_out, tt)

    split_in_kernel = want_split and tt >= 128   # tiny problems: pre-split is free
    use_roll = _roll_ok() and tt >= 128
    mask_from = T // 2 if (split_in_kernel and not single_tile and T % 2 == 1) else None

    # ---- operands -----------------------------------------------------------
    x_in = x.astype(cdt) if x.dtype != cdt else x
    if split_in_kernel:
        if single_tile and T % 2 == 1:           # defensive; not reachable today
            x_in = jnp.pad(x_in, ((0, 0), (0, 0), (0, 1)))
        x_arg = x_in
        in_spec = pl.BlockSpec((1, C, 2 * tt), lambda b, j: (b, 0, j))
    else:
        # Fallback layout: pre-split even/odd phases in XLA (one extra HBM pass).
        x_even = x_in[:, :, 0::2]
        x_odd = x_in[:, :, 1::2]
        if x_odd.shape[2] < T_out:
            x_odd = jnp.pad(x_odd, ((0, 0), (0, 0), (0, T_out - x_odd.shape[2])))
        x_arg = jnp.concatenate([x_even, x_odd], axis=1)          # (B, 2C, T_out)
        in_spec = pl.BlockSpec((1, 2 * C, tt), lambda b, j: (b, 0, j))

    w_kcc = jnp.transpose(weight, (2, 0, 1)).astype(cdt)          # (3, C, C) resident
    b_col = bias.astype(jnp.float32).reshape(C, 1)

    w_bytes = 3 * C * C * bpe_in
    single_buffer_w = w_bytes > (2 << 20)
    w_spec = _resident_spec((3, C, C), single_buffer=single_buffer_w)
    b_spec = _resident_spec((C, 1), single_buffer=False)

    # TODO(synk): tile the output-channel dim (and/or force bf16 weights) when
    # 3*C*C*bpe alone approaches the per-core VMEM capacity (v7x: 64 MiB).
    resident = w_bytes * (1 if single_buffer_w else 2) + 2 * 4 * C + C * bpe_in
    vmem_limit = int(min(limit_cap,
                         max(32 * 2**20, per_lane * tt + resident + (4 << 20))))

    cost = pl.CostEstimate(
        flops=6 * C * C * T_out * B,
        transcendentals=0,
        bytes_accessed=int(B * C * T * bpe_in + B * C * T_out * bpe_out + w_bytes),
    )

    kernel = functools.partial(
        _down1d_kernel, tt=tt, split_in_kernel=split_in_kernel,
        mask_from=mask_from, use_roll=use_roll, precision=precision)

    out = pl.pallas_call(
        kernel,
        out_shape=jax.ShapeDtypeStruct((B, C, T_out), out_dtype),
        grid_spec=pltpu.PrefetchScalarGridSpec(
            num_scalar_prefetch=0,
            grid=(B, n_tiles),
            in_specs=[in_spec, w_spec, b_spec],
            out_specs=pl.BlockSpec((1, C, tt), lambda b, j: (b, 0, j)),
            scratch_shapes=[pltpu.VMEM((C, 1), cdt)],     # carried boundary column
        ),
        compiler_params=pltpu.CompilerParams(
            # Batch axis may be split across cores (megacore); the time axis MUST
            # stay sequential ("arbitrary") because of the carried column.
            # TODO(synk): for B < num_cores on v7x, add a second parallel split
            # over output time (re-reading one boundary column per split).
            dimension_semantics=("parallel", "arbitrary"),
            vmem_limit_bytes=vmem_limit,
        ),
        cost_estimate=cost,
    )(x_arg, w_kcc, b_col)
    return out


# ----------------------------------------------------------------------------
# Self test
# ----------------------------------------------------------------------------
if __name__ == "__main__":
    def conv_ref(x, w, b):
        return jax.lax.conv_general_dilated(
            x, w, window_strides=(2,), padding=[(1, 1)],
            dimension_numbers=("NCH", "OIH", "NCH"),
            precision=jax.lax.Precision.HIGHEST) + b[None, :, None]

    def make(key, B, C, T):
        kx, kw, kb = jax.random.split(key, 3)
        x = jax.random.normal(kx, (B, C, T), dtype=jnp.float32)
        bound = 1.0 / (C * 3) ** 0.5
        w = jax.random.uniform(kw, (C, C, 3), minval=-bound, maxval=bound,
                               dtype=jnp.float32)
        b = jax.random.uniform(kb, (C,), minval=-bound, maxval=bound,
                               dtype=jnp.float32)
        return x, w, b

    # 1) small, even T (dim = 4, as in Downsample1d(4))
    x, w, b = make(jax.random.PRNGKey(0), 2, 4, 16)
    out = jax.block_until_ready(downsample1d(x, w, b))
    ref = conv_ref(x, w, b)
    assert out.shape == ref.shape == (2, 4, 8)
    assert jnp.allclose(out, ref, atol=1e-4, rtol=1e-4), \
        float(jnp.max(jnp.abs(out - ref)))

    # 2) odd T (exercises the conv right-pad handling)
    x, w, b = make(jax.random.PRNGKey(1), 2, 4, 15)
    out = jax.block_until_ready(downsample1d(x, w, b))
    ref = conv_ref(x, w, b)
    assert out.shape == ref.shape == (2, 4, 8)
    assert jnp.allclose(out, ref, atol=1e-4, rtol=1e-4), \
        float(jnp.max(jnp.abs(out - ref)))

    # 3) long, odd-length sequence: multi-tile path, carried boundary column,
    #    tail masking and partial edge blocks.
    x, w, b = make(jax.random.PRNGKey(2), 2, 8, 4999)
    out = jax.block_until_ready(downsample1d(x, w, b, time_tile=1024))
    ref = conv_ref(x, w, b)
    assert out.shape == ref.shape == (2, 8, 2500)
    assert jnp.allclose(out, ref, atol=1e-4, rtol=1e-4), \
        float(jnp.max(jnp.abs(out - ref)))

    # 4) bf16 compute path (v6e/v7x fast path); accumulation stays f32.
    x, w, b = make(jax.random.PRNGKey(3), 2, 4, 16)
    xb = x.astype(jnp.bfloat16)
    out = jax.block_until_ready(
        downsample1d(xb, w, b, compute_dtype=jnp.bfloat16))
    wq = w.astype(jnp.bfloat16).astype(jnp.float32)
    ref = conv_ref(xb.astype(jnp.float32), wq, b)
    assert out.shape == ref.shape
    assert jnp.allclose(out.astype(jnp.float32), ref, atol=5e-2, rtol=5e-2), \
        float(jnp.max(jnp.abs(out.astype(jnp.float32) - ref)))

    print("KERNEL_OK")
</pallas_src>

<mosaic_0001>
module attributes {stable_mosaic.version = 11 : i64} {
  func.func @k(%arg0: memref<1x8x256xf32, #tpu.memory_space<vmem>>, %arg1: memref<8x128xf32, #tpu.memory_space<vmem>>, %arg2: memref<8x128xf32, #tpu.memory_space<vmem>>) attributes {dimension_semantics = [], scalar_prefetch = 0 : i64, scratch_operands = 0 : i64, tpu.core_type = #tpu.core_type<tc>} {
    %c0 = arith.constant 0 : index
    %c0_0 = arith.constant 0 : index
    %c0_1 = arith.constant 0 : index
    %0 = tpu.strided_load %arg0[%c0, %c0_0, %c0_1] {strides = array<i32: 1, 1, 2>} : memref<1x8x256xf32, #tpu.memory_space<vmem>>, vector<1x8x128xf32>
    %1 = vector.shape_cast %0 : vector<1x8x128xf32> to vector<8x128xf32>
    %c0_2 = arith.constant 0 : index
    %c0_3 = arith.constant 0 : index
    %2 = vector.load %arg1[%c0_2, %c0_3] : memref<8x128xf32, #tpu.memory_space<vmem>>, vector<8x128xf32>
    tpu.vector_store %arg1[%c0_2, %c0_3], %1 {strides = array<i32>} : memref<8x128xf32, #tpu.memory_space<vmem>>, vector<8x128xf32>,
    %c0_4 = arith.constant 0 : index
    %c0_5 = arith.constant 0 : index
    %c1 = arith.constant 1 : index
    %3 = tpu.strided_load %arg0[%c0_4, %c0_5, %c1] {strides = array<i32: 1, 1, 2>} : memref<1x8x256xf32, #tpu.memory_space<vmem>>, vector<1x8x128xf32>
    %4 = vector.shape_cast %3 : vector<1x8x128xf32> to vector<8x128xf32>
    %c0_6 = arith.constant 0 : index
    %c0_7 = arith.constant 0 : index
    %5 = vector.load %arg2[%c0_6, %c0_7] : memref<8x128xf32, #tpu.memory_space<vmem>>, vector<8x128xf32>
    tpu.vector_store %arg2[%c0_6, %c0_7], %4 {strides = array<i32>} : memref<8x128xf32, #tpu.memory_space<vmem>>, vector<8x128xf32>,
    return
  }
}

module attributes {stable_mosaic.version = 11 : i64} {
  func.func @k(%arg0: memref<8x128xf32, #tpu.memory_space<vmem>>, %arg1: memref<8x128xf32, #tpu.memory_space<vmem>>) attributes {dimension_semantics = [], scalar_prefetch = 0 : i64, scratch_operands = 0 : i64, tpu.core_type = #tpu.core_type<tc>} {
    %c0 = arith.constant 0 : index
    %c0_0 = arith.constant 0 : index
    %0 = vector.load %arg0[%c0, %c0_0] : memref<8x128xf32, #tpu.memory_space<vmem>>, vector<8x128xf32>
    %c1_i32 = arith.constant 1 : i32
    %1 = tpu.dynamic_rotate %0 by %c1_i32 dim 1 : vector<8x128xf32>, i32 -> vector<8x128xf32>
    %c0_1 = arith.constant 0 : index
    %c0_2 = arith.constant 0 : index
    %2 = vector.load %arg1[%c0_1, %c0_2] : memref<8x128xf32, #tpu.memory_space<vmem>>, vector<8x128xf32>
    tpu.vector_store %arg1[%c0_1, %c0_2], %1 {strides = array<i32>} : memref<8x128xf32, #tpu.memory_space<vmem>>, vector<8x128xf32>,
    return
  }
}

module attributes {stable_mosaic.version = 11 : i64} {
  func.func @_down1d_kernel(%arg0: i32, %arg1: i32, %arg2: memref<1x8x8xf32, #tpu.memory_space<vmem>>, %arg3: memref<3x4x4xf32, #tpu.memory_space<vmem>>, %arg4: memref<4x1xf32, #tpu.memory_space<vmem>>, %arg5: memref<1x4x8xf32, #tpu.memory_space<vmem>>, %arg6: memref<4x1xf32, #tpu.memory_space<vmem>>) attributes {dimension_semantics = [#tpu.dimension_semantics<parallel>, #tpu.dimension_semantics<arbitrary>], iteration_bounds = array<i64: 2, 1>, scalar_prefetch = 0 : i64, scratch_operands = 1 : i64, tpu.core_type = #tpu.core_type<tc>, window_params = [{transform_indices = @transform_0, window_bounds = array<i64: 1, 8, 8>}, {pipeline_mode = #tpu.pipeline_mode<synchronous>, transform_indices = @transform_1, window_bounds = array<i64: 3, 4, 4>}, {pipeline_mode = #tpu.pipeline_mode<synchronous>, transform_indices = @transform_2, window_bounds = array<i64: 4, 1>}, {transform_indices = @transform_3, window_bounds = array<i64: 1, 4, 8>}]} {
    %c0_i32 = arith.constant 0 : i32
    %0 = arith.cmpi eq, %arg1, %c0_i32 : i32
    %1 = arith.extui %0 : i1 to i32
    %c0_i32_0 = arith.constant 0 : i32
    %2 = arith.cmpi ne, %1, %c0_i32_0 : i32
    scf.if %2 {
      %cst_21 = arith.constant 0.000000e+00 : f32
      %29 = vector.broadcast %cst_21 : f32 to vector<4x1xf32>
      %c0_22 = arith.constant 0 : index
      %c0_23 = arith.constant 0 : index
      %30 = vector.load %arg6[%c0_22, %c0_23] : memref<4x1xf32, #tpu.memory_space<vmem>>, vector<4x1xf32>
      tpu.vector_store %arg6[%c0_22, %c0_23], %29 {strides = array<i32>} : memref<4x1xf32, #tpu.memory_space<vmem>>, vector<4x1xf32>,
    } else {
    }
    %c0 = arith.constant 0 : index
    %c0_1 = arith.constant 0 : index
    %c0_2 = arith.constant 0 : index
    %3 = vector.load %arg2[%c0, %c0_1, %c0_2] : memref<1x8x8xf32, #tpu.memory_space<vmem>>, vector<1x8x8xf32>
    %4 = vector.shape_cast %3 : vector<1x8x8xf32> to vector<8x8xf32>
    %5 = vector.extract_strided_slice %4 {offsets = [0, 0], sizes = [4, 8], strides = [1, 1]} : vector<8x8xf32> to vector<4x8xf32>
    %6 = vector.extract_strided_slice %4 {offsets = [4, 0], sizes = [4, 8], strides = [1, 1]} : vector<8x8xf32> to vector<4x8xf32>
    %c0_3 = arith.constant 0 : index
    %c0_4 = arith.constant 0 : index
    %7 = vector.load %arg6[%c0_3, %c0_4] : memref<4x1xf32, #tpu.memory_space<vmem>>, vector<4x1xf32>
    %8 = vector.extract_strided_slice %6 {offsets = [0, 0], sizes = [4, 7], strides = [1, 1]} : vector<4x8xf32> to vector<4x7xf32>
    %9 = tpu.concatenate %7, %8 in 1 : vector<4x1xf32>, vector<4x7xf32> -> vector<4x8xf32>
    %c1 = arith.constant 1 : index
    %c0_5 = arith.constant 0 : index
    %c0_6 = arith.constant 0 : index
    %10 = vector.load %arg3[%c1, %c0_5, %c0_6] : memref<3x4x4xf32, #tpu.memory_space<vmem>>, vector<1x4x4xf32>
    %11 = vector.shape_cast %10 : vector<1x4x4xf32> to vector<4x4xf32>
    %cst = arith.constant dense<0.000000e+00> : vector<4x8xf32>
    %12 = tpu.matmul %11, %5, %cst {dimension_numbers = #tpu.dot_dimension_numbers<[1], [0], [0], [1], [0, 0, 1, 1], [], []>, precision = #tpu.contract_precision<fp32>} : vector<4x4xf32>, vector<4x8xf32>, vector<4x8xf32> -> vector<4x8xf32>
    %c2 = arith.constant 2 : index
    %c0_7 = arith.constant 0 : index
    %c0_8 = arith.constant 0 : index
    %13 = vector.load %arg3[%c2, %c0_7, %c0_8] : memref<3x4x4xf32, #tpu.memory_space<vmem>>, vector<1x4x4xf32>
    %14 = vector.shape_cast %13 : vector<1x4x4xf32> to vector<4x4xf32>
    %cst_9 = arith.constant dense<0.000000e+00> : vector<4x8xf32>
    %15 = tpu.matmul %14, %6, %cst_9 {dimension_numbers = #tpu.dot_dimension_numbers<[1], [0], [0], [1], [0, 0, 1, 1], [], []>, precision = #tpu.contract_precision<fp32>} : vector<4x4xf32>, vector<4x8xf32>, vector<4x8xf32> -> vector<4x8xf32>
    %16 = arith.addf %12, %15 : vector<4x8xf32>
    %c0_10 = arith.constant 0 : index
    %c0_11 = arith.constant 0 : index
    %c0_12 = arith.constant 0 : index
    %17 = vector.load %arg3[%c0_10, %c0_11, %c0_12] : memref<3x4x4xf32, #tpu.memory_space<vmem>>, vector<1x4x4xf32>
    %18 = vector.shape_cast %17 : vector<1x4x4xf32> to vector<4x4xf32>
    %cst_13 = arith.constant dense<0.000000e+00> : vector<4x8xf32>
    %19 = tpu.matmul %18, %9, %cst_13 {dimension_numbers = #tpu.dot_dimension_numbers<[1], [0], [0], [1], [0, 0, 1, 1], [], []>, precision = #tpu.contract_precision<fp32>} : vector<4x4xf32>, vector<4x8xf32>, vector<4x8xf32> -> vector<4x8xf32>
    %20 = arith.addf %16, %19 : vector<4x8xf32>
    %c0_14 = arith.constant 0 : index
    %c0_15 = arith.constant 0 : index
    %21 = vector.load %arg4[%c0_14, %c0_15] : memref<4x1xf32, #tpu.memory_space<vmem>>, vector<4x1xf32>
    %22 = vector.broadcast %21 : vector<4x1xf32> to vector<4x8xf32>
    %23 = arith.addf %20, %22 : vector<4x8xf32>
    %c0_16 = arith.constant 0 : index
    %c0_17 = arith.constant 0 : index
    %c0_18 = arith.constant 0 : index
    %24 = vector.load %arg5[%c0_16, %c0_17, %c0_18] : memref<1x4x8xf32, #tpu.memory_space<vmem>>, vector<1x4x8xf32>
    %25 = vector.shape_cast %24 : vector<1x4x8xf32> to vector<4x8xf32>
    %26 = vector.shape_cast %23 : vector<4x8xf32> to vector<1x4x8xf32>
    tpu.vector_store %arg5[%c0_16, %c0_17, %c0_18], %26 {strides = array<i32>} : memref<1x4x8xf32, #tpu.memory_space<vmem>>, vector<1x4x8xf32>,
    %27 = vector.extract_strided_slice %6 {offsets = [0, 7], sizes = [4, 1], strides = [1, 1]} : vector<4x8xf32> to vector<4x1xf32>
    %c0_19 = arith.constant 0 : index
    %c0_20 = arith.constant 0 : index
    %28 = vector.load %arg6[%c0_19, %c0_20] : memref<4x1xf32, #tpu.memory_space<vmem>>, vector<4x1xf32>
    tpu.vector_store %arg6[%c0_19, %c0_20], %27 {strides = array<i32>} : memref<4x1xf32, #tpu.memory_space<vmem>>, vector<4x1xf32>,
    return
  }
  func.func @transform_0(%arg0: i32, %arg1: i32) -> (i32, i32, i32) {
    %c0_i32 = arith.constant 0 : i32
    %c0_i32_0 = arith.constant 0 : i32
    return %arg0, %c0_i32, %arg1 : i32, i32, i32
  }
  func.func @transform_1(%arg0: i32, %arg1: i32) -> (i32, i32, i32) {
    %c0_i32 = arith.constant 0 : i32
    %c0_i32_0 = arith.constant 0 : i32
    %c0_i32_1 = arith.constant 0 : i32
    %c0_i32_2 = arith.constant 0 : i32
    return %c0_i32, %c0_i32_0, %c0_i32_1 : i32, i32, i32
  }
  func.func @transform_2(%arg0: i32, %arg1: i32) -> (i32, i32) {
    %c0_i32 = arith.constant 0 : i32
    %c0_i32_0 = arith.constant 0 : i32
    %c0_i32_1 = arith.constant 0 : i32
    return %c0_i32, %c0_i32_0 : i32, i32
  }
  func.func @transform_3(%arg0: i32, %arg1: i32) -> (i32, i32, i32) {
    %c0_i32 = arith.constant 0 : i32
    %c0_i32_0 = arith.constant 0 : i32
    return %arg0, %c0_i32, %arg1 : i32, i32, i32
  }
}

</mosaic_0001>

<llo_original>
// kernel: tpu_custom_call.1
$region0: #{tpu_custom_call.1}
  #allocation0 [shape = 'u32[]', space=smem, size = 0x4, offset = 0x4, fixed_abs, tag = 'smem constant byte address 0x4 - core index']
  #allocation1 [shape = 'u32[144,128]{1,0:T(1,128)}', space=vmem, size = 0x12000, scoped, tag = 'internal scratch']
  %s0 = inlined_call_operand.hbm [shape: f32[8,128], index: 0, kind: input, shape index: {}]
  %s1 = inlined_call_operand.hbm [shape: f32[8,128], index: 1, kind: output, shape index: {}]
  %s2 = sld [smem:[#allocation0]]
  $region18: #{tpu_custom_call.1} parent=0
    _
  %s4 = ssub.s32 1, %s2
  %s5 = scalar_select 0, %s4, %s2
  $region1: #{tpu_custom_call.1} parent=0
    #allocation2 [shape = 'u8[4096]{0}', space=vmem, size = 0x1000, scoped, tag = 'input window, operand 0, single buffered']
    #allocation3 [shape = 's32[1]{0}', space=sflag, size = 0x4, scoped, tag = 'scoped memory for tpu_custom_call.1']
    #allocation4 [shape = 's32[1]{0}', space=sflag, size = 0x4, scoped, tag = 'scoped memory for tpu_custom_call.1']
    #allocation5 [shape = 'u8[4096]{0}', space=vmem, size = 0x1000, scoped, tag = 'output window, operand 0, single buffered']
    %6 = vsyncpa [#allocation3], 0
    %7 = vsyncpa [#allocation4], 0
    // Predicated region
    $region2: #{tpu_custom_call.1} parent=1 // pred_check
      _
    $region3: #{tpu_custom_call.1} parent=1 // pred_check_branch
      %9 = sbr.rel (0) target = $region5
    $region4: #{tpu_custom_call.1} parent=1 // pred_region
      %s11 = ssub.s32 128, 128
      %12 = vsyncadd [#allocation3], %s11
      %s14 = sshll.u32 [#allocation2], 4
      %s15 = int_to_ptr.vmem [resolvable:$true] %s14
      %17 = dma.hbm_to_vmem [thread:$0]  %s0, 128, %s15, [#allocation3]
    $region5: #{tpu_custom_call.1} parent=1 // pred_fallthru
      _
    // Predicated region
    $region6: #{tpu_custom_call.1} parent=1 // pred_check
      _
    $region7: #{tpu_custom_call.1} parent=1 // pred_check_branch
      %19 = sbr.rel (0) target = $region9
    $region8: #{tpu_custom_call.1} parent=1 // pred_region
      %20 = dma.done [#allocation3], 128
    $region9: #{tpu_custom_call.1} parent=1 // pred_fallthru
      _
    %v21 = vld [vmem:[#allocation2] sm:$0xff]
    %22 = vrot.lane.b32.xlu0 %v21, 1
    %v23 = vpop.permute.xlu0 %22
    %24 = vst [vmem:[#allocation5] sm:$0xff] %v23
    // Predicated region
    $region10: #{tpu_custom_call.1} parent=1 // pred_check
      _
    $region11: #{tpu_custom_call.1} parent=1 // pred_check_branch
      %26 = sbr.rel (0) target = $region13
    $region12: #{tpu_custom_call.1} parent=1 // pred_region
      %s28 = ssub.s32 128, 128
      %29 = vsyncadd [#allocation4], %s28
      %s31 = sshll.u32 [#allocation5], 4
      %s32 = int_to_ptr.vmem [resolvable:$true] %s31
      %34 = dma.vmem_to_hbm [thread:$0]  %s32, 128, %s1, [#allocation4]
    $region13: #{tpu_custom_call.1} parent=1 // pred_fallthru
      _
    // Predicated region
    $region14: #{tpu_custom_call.1} parent=1 // pred_check
      _
    $region15: #{tpu_custom_call.1} parent=1 // pred_check_branch
      %36 = sbr.rel (0) target = $region17
    $region16: #{tpu_custom_call.1} parent=1 // pred_region
      %37 = dma.done [#allocation4], 128
    $region17: #{tpu_custom_call.1} parent=1 // pred_fallthru
      _
    %38 = vsyncpa [#allocation3], 1
    %39 = vsyncpa [#allocation4], 1

// kernel: tpu_custom_call.1
$region0: #{tpu_custom_call.1}
  #allocation0 [shape = 'u32[]', space=smem, size = 0x4, offset = 0x4, fixed_abs, tag = 'smem constant byte address 0x4 - core index']
  #allocation1 [shape = 'u32[144,128]{1,0:T(1,128)}', space=vmem, size = 0x12000, scoped, tag = 'internal scratch']
  #allocation2 [shape = 'f32[4,1]{1,0:T(4,128)}', space=vmem, size = 0x800, scoped, tag = 'scratch operand']
  %s0 = inlined_call_operand.hbm [shape: f32[2,8,8], index: 0, kind: input, shape index: {}]
  %s1 = inlined_call_operand.hbm [shape: f32[3,4,4], index: 1, kind: input, shape index: {}]
  %s2 = inlined_call_operand.vmem [shape: f32[4,1], index: 2, kind: input, shape index: {}]
  %s3 = inlined_call_operand.hbm [shape: f32[2,4,8], index: 3, kind: output, shape index: {}]
  %s4 = sld [smem:[#allocation0]]
  $region57: #{tpu_custom_call.1} parent=0
    _
  %s6 = ssub.s32 1, %s4
  %s7 = scalar_select 0, %s6, %s4
  $region1: #{tpu_custom_call.1} parent=0
    #allocation3 [shape = 'u8[8192]{0}', space=vmem, size = 0x2000, scoped, tag = 'input window, operand 0']
    #allocation4 [shape = 's32[2]{0}', space=sflag, size = 0x8, scoped, tag = 'scoped memory for tpu_custom_call.1']
    #allocation5 [shape = 's32[2]{0}', space=sflag, size = 0x8, scoped, tag = 'scoped memory for tpu_custom_call.1']
    #allocation6 [shape = 'u8[6144]{0}', space=vmem, size = 0x1800, scoped, tag = 'input window, operand 1, single buffered']
    #allocation7 [shape = 's32[1]{0}', space=sflag, size = 0x4, scoped, tag = 'scoped memory for tpu_custom_call.1']
    #allocation8 [shape = 'u8[4096]{0}', space=vmem, size = 0x1000, scoped, tag = 'output window, operand 0']
    %8 = vsyncpa [#allocation4], 0
    %s9 = scalar_lea.sflag [#allocation4], 1
    %10 = vsyncpa %s9, 0
    %11 = vsyncpa [#allocation7], 0
    %12 = vsyncpa [#allocation5], 0
    %s13 = scalar_lea.sflag [#allocation5], 1
    %14 = vsyncpa %s13, 0
    loop: start=0, step=1, limit=4
    $region2: #{tpu_custom_call.1} parent=1 // loop_pre_header
      _
    $region3: #{tpu_custom_call.1} parent=1 // loop_header
      %s16 = sphi 0, %s20
      %p17 = scmp.ge.s32.totalorder %s16, 4
      %s23 = sphi 0, %s35
      %s24 = sphi 0, %s31
      %s25 = sphi 0, %s23
      %s26 = sphi 0, %s24
      %s27 = sphi 0, %s25
      %s28 = sphi 0, %s26
      %s40 = sphi 0, %s42
      %s43 = sphi 0, %s40
      %s44 = sphi 0, %s43
      %s60 = sphi 0, %s44
      %s64 = sphi 0, %s64
      %s66 = sphi 0, %s64
      %s67 = sphi 0, %s66
      %s81 = sphi 0, %s67
      %s85 = sphi 0, %s85
      %s87 = sphi 0, %s85
      %s88 = sphi 0, %s87
      %s102 = sphi 0, %s88
      %s110 = sphi 0, %s112
      %s113 = sphi 0, %s110
      %s114 = sphi 0, %s113
      %s130 = sphi 0, %s114
    $region4: #{tpu_custom_call.1} parent=1 // loop_header_branch
      %19 = sbr.rel (%p17) target = $region8
    $region5: #{tpu_custom_call.1} parent=1 // loop_body
      %s21 = ssub.s32 %s16, 1
      %s22 = ssub.s32 %s16, 2
      %s29 = sadd.s32 1, %s24
      %p30 = scmp.ge.s32.totalorder %s29, 1
      %s31 = scalar_select %p30, 0, %s29
      %s32 = sadd.s32 1, %s23
      %s33 = scalar_select %p30, %s32, %s23
      %p34 = scmp.ge.s32.totalorder %s33, 2
      %s35 = scalar_select %p34, 0, %s33
      %s36 = ssub.s32 %s23, %s35
      %s37 = ssub.s32 %s24, %s31
      %s38 = sor.u32 %s36, %s37
      %p39 = scmp.eq.s32.totalorder %s38, 0
      %s41 = sadd.s32 %s40, 1
      %s42 = scalar_select %p39, %s40, %s41
      %p45 = pneg %p39
      %p46 = scmp.eq.s32.totalorder %s16, 1
      %p47 = por %p45, %p46
      %p48 = scmp.ne.s32.totalorder %s40, %s43
      %p49 = scmp.eq.s32.totalorder %s16, 0
      %p50 = por %p48, %p49
      %p51 = scmp.ne.s32.totalorder %s40, %s43
      %p52 = scmp.eq.s32.totalorder %s21, 1
      %p53 = por %p51, %p52
      %p54 = scmp.ne.s32.totalorder %s43, %s44
      %p55 = scmp.eq.s32.totalorder %s21, 0
      %p56 = por %p54, %p55
      %p57 = scmp.ne.s32.totalorder %s43, %s44
      %p58 = scmp.eq.s32.totalorder %s22, 1
      %p59 = por %p57, %p58
      %p61 = scmp.ne.s32.totalorder %s44, %s60
      %p62 = scmp.eq.s32.totalorder %s22, 0
      %p63 = por %p61, %p62
      %s65 = sadd.s32 %s64, 1
      %p68 = scmp.eq.s32.totalorder %s16, 1
      %p69 = scmp.ne.s32.totalorder %s64, %s66
      %p70 = scmp.eq.s32.totalorder %s16, 0
      %p71 = por %p69, %p70
      %p72 = scmp.ne.s32.totalorder %s64, %s66
      %p73 = scmp.eq.s32.totalorder %s21, 1
      %p74 = por %p72, %p73
      %p75 = scmp.ne.s32.totalorder %s66, %s67
      %p76 = scmp.eq.s32.totalorder %s21, 0
      %p77 = por %p75, %p76
      %p78 = scmp.ne.s32.totalorder %s66, %s67
      %p79 = scmp.eq.s32.totalorder %s22, 1
      %p80 = por %p78, %p79
      %p82 = scmp.ne.s32.totalorder %s67, %s81
      %p83 = scmp.eq.s32.totalorder %s22, 0
      %p84 = por %p82, %p83
      %s86 = sadd.s32 %s85, 1
      %p89 = scmp.eq.s32.totalorder %s16, 1
      %p90 = scmp.ne.s32.totalorder %s85, %s87
      %p91 = scmp.eq.s32.totalorder %s16, 0
      %p92 = por %p90, %p91
      %p93 = scmp.ne.s32.totalorder %s85, %s87
      %p94 = scmp.eq.s32.totalorder %s21, 1
      %p95 = por %p93, %p94
      %p96 = scmp.ne.s32.totalorder %s87, %s88
      %p97 = scmp.eq.s32.totalorder %s21, 0
      %p98 = por %p96, %p97
      %p99 = scmp.ne.s32.totalorder %s87, %s88
      %p100 = scmp.eq.s32.totalorder %s22, 1
      %p101 = por %p99, %p100
      %p103 = scmp.ne.s32.totalorder %s88, %s102
      %p104 = scmp.eq.s32.totalorder %s22, 0
      %p105 = por %p103, %p104
      %s106 = ssub.s32 %s23, %s35
      %s107 = ssub.s32 %s24, %s31
      %s108 = sor.u32 %s106, %s107
      %p109 = scmp.eq.s32.totalorder %s108, 0
      %s111 = sadd.s32 %s110, 1
      %s112 = scalar_select %p109, %s110, %s111
      %p115 = pneg %p109
      %p116 = scmp.eq.s32.totalorder %s16, 1
      %p117 = por %p115, %p116
      %p118 = scmp.ne.s32.totalorder %s110, %s113
      %p119 = scmp.eq.s32.totalorder %s16, 0
      %p120 = por %p118, %p119
      %p121 = scmp.ne.s32.totalorder %s110, %s113
      %p122 = scmp.eq.s32.totalorder %s21, 1
      %p123 = por %p121, %p122
      %p124 = scmp.ne.s32.totalorder %s113, %s114
      %p125 = scmp.eq.s32.totalorder %s21, 0
      %p126 = por %p124, %p125
      %p127 = scmp.ne.s32.totalorder %s113, %s114
      %p128 = scmp.eq.s32.totalorder %s22, 1
      %p129 = por %p127, %p128
      %p131 = scmp.ne.s32.totalorder %s114, %s130
      %p132 = scmp.eq.s32.totalorder %s22, 0
      %p133 = por %p131, %p132
      %p134 = scmp.le.s32.totalorder 1, %s16
      %p135 = scmp.lt.s32.totalorder %s16, 3
      %p136 = pnand %p134, %p135
      %p137 = pneg %p136
      // Predicated region
      $region9: #{tpu_custom_call.1} parent=5 // pred_check
        _
      $region10: #{tpu_custom_call.1} parent=5 // pred_check_branch
        %139 = sbr.rel (%p136) target = $region12
      $region11: #{tpu_custom_call.1} parent=5 // pred_region
        %s140 = ssub.s32 %s16, 1
        // Predicated region
        $region13: #{tpu_custom_call.1} parent=11 // pred_check
          %p141 = pneg %p77
        $region14: #{tpu_custom_call.1} parent=11 // pred_check_branch
          %143 = sbr.rel (%p141) target = $region16
        $region15: #{tpu_custom_call.1} parent=11 // pred_region
          %s145 = ssub.s32 192, 192
          %146 = vsyncadd [#allocation7], %s145
          %s147 = sshll.u32 [#allocation6], 4
          %s148 = int_to_ptr.vmem [resolvable:$true] %s147
          %153 = dma.hbm_to_vmem [thread:$0]  %s1, 192, %s148, [#allocation7], 64, 64, 4
        $region16: #{tpu_custom_call.1} parent=11 // pred_fallthru
          _
        // Predicated region
        $region17: #{tpu_custom_call.1} parent=11 // pred_check
          %p154 = pneg %p98
        $region18: #{tpu_custom_call.1} parent=11 // pred_check_branch
          %156 = sbr.rel (%p154) target = $region20
        $region19: #{tpu_custom_call.1} parent=11 // pred_region
          _
        $region20: #{tpu_custom_call.1} parent=11 // pred_fallthru
          _
      $region12: #{tpu_custom_call.1} parent=5 // pred_fallthru
        _
      %p157 = scmp.lt.s32.totalorder %s16, 2
      // Predicated region
      $region21: #{tpu_custom_call.1} parent=5 // pred_check
        %p158 = pneg %p157
      $region22: #{tpu_custom_call.1} parent=5 // pred_check_branch
        %160 = sbr.rel (%p158) target = $region24
      $region23: #{tpu_custom_call.1} parent=5 // pred_region
        // Predicated region
        $region25: #{tpu_custom_call.1} parent=23 // pred_check
          %p161 = pneg %p50
        $region26: #{tpu_custom_call.1} parent=23 // pred_check_branch
          %163 = sbr.rel (%p161) target = $region28
        $region27: #{tpu_custom_call.1} parent=23 // pred_region
          %s164 = sand.u32 %s40, 1
          %s165 = scalar_lea.sflag [#allocation4], %s164
          %s166 = sand.u32 %s40, 1
          %s167 = smul.addr %s166, 8
          %s168 = scalar_lea.vmem [#allocation3], %s167
          %s170 = ssub.s32 128, 128
          %171 = vsyncadd %s165, %s170
          %s172 = sadd.s32 %s24, %s23
          %s173 = smul.addr %s172, 128
          %s174 = scalar_lea.hbm %s0, %s173
          %s176 = sshll.u32 %s168, 4
          %s177 = int_to_ptr.vmem [resolvable:$true] %s176
          %179 = dma.hbm_to_vmem [thread:$0]  %s174, 128, %s177, %s165
        $region28: #{tpu_custom_call.1} parent=23 // pred_fallthru
          _
      $region24: #{tpu_custom_call.1} parent=5 // pred_fallthru
        _
      %p180 = scmp.le.s32.totalorder 1, %s16
      %p181 = scmp.lt.s32.totalorder %s16, 3
      %p182 = pnand %p180, %p181
      %p183 = pneg %p182
      // Predicated region
      $region29: #{tpu_custom_call.1} parent=5 // pred_check
        _
      $region30: #{tpu_custom_call.1} parent=5 // pred_check_branch
        %185 = sbr.rel (%p182) target = $region32
      $region31: #{tpu_custom_call.1} parent=5 // pred_region
        %s186 = ssub.s32 %s16, 1
        %s187 = sand.u32 %s43, 1
        %s188 = scalar_lea.sflag [#allocation4], %s187
        %s189 = sand.u32 %s43, 1
        %s190 = smul.addr %s189, 8
        %s191 = scalar_lea.vmem [#allocation3], %s190
        // Predicated region
        $region33: #{tpu_custom_call.1} parent=31 // pred_check
          %p192 = pneg %p56
        $region34: #{tpu_custom_call.1} parent=31 // pred_check_branch
          %194 = sbr.rel (%p192) target = $region36
        $region35: #{tpu_custom_call.1} parent=31 // pred_region
          %195 = dma.done %s188, 128
        $region36: #{tpu_custom_call.1} parent=31 // pred_fallthru
          _
        // Predicated region
        $region37: #{tpu_custom_call.1} parent=31 // pred_check
          %p196 = pneg %p77
        $region38: #{tpu_custom_call.1} parent=31 // pred_check_branch
          %198 = sbr.rel (%p196) target = $region40
        $region39: #{tpu_custom_call.1} parent=31 // pred_region
          %199 = dma.done [#allocation7], 192
        $region40: #{tpu_custom_call.1} parent=31 // pred_fallthru
          _
        %s200 = sand.u32 %s43, 1
        %s201 = scalar_lea.sflag [#allocation4], %s200
        %s202 = sand.u32 %s43, 1
        %s203 = smul.addr %s202, 8
        %s204 = scalar_lea.vmem [#allocation3], %s203
        %p205 = pneg %p56
        %p206 = pneg %p53
        %p207 = pneg %p77
        %p208 = pneg %p74
        %p209 = pneg %p98
        %p210 = pneg %p95
        %p211 = pneg %p126
        %p212 = pneg %p123
        %s213 = sand.u32 %s113, 1
        %s214 = scalar_lea.sflag [#allocation5], %s213
        %s215 = sand.u32 %s113, 1
        %s216 = smul.addr %s215, 4
        %s217 = scalar_lea.vmem [#allocation8], %s216
        %p218 = scmp.eq.s32.totalorder %s26, 0
        // Predicated region
        $region41: #{tpu_custom_call.1} parent=31 // pred_check
          %p219 = pneg %p218
        $region42: #{tpu_custom_call.1} parent=31 // pred_check_branch
          %221 = sbr.rel (%p219) target = $region44
        $region43: #{tpu_custom_call.1} parent=31 // pred_region
          %vm222 = vcmask 3072
          %223 = vst.msk [vmem:[#allocation2] sm:$0xf] %vm222, 0.0
        $region44: #{tpu_custom_call.1} parent=31 // pred_fallthru
          _
        %v224 = vld [vmem:[%s191] sm:$0xff]
        %v225 = vld [vmem:[#allocation2] sm:$0xf]
        %v227 = vrot.slane %v224, 4
        %228 = vrot.lane.b32.xlu0 %v227, 1
        %v229 = vpop.permute.xlu0 %228
        %vm231 = vcmask 7168
        %v232 = vsel %vm231, %v225, %v229
        %s233 = scalar_lea.vmem [#allocation6], 4
        %v234 = vld [vmem:[%s233] sm:$0xf]
        %s235 = scalar_lea.vmem [#allocation6], 8
        %v236 = vld [vmem:[%s235] sm:$0xf]
        %vm237 = vcmask 31744
        %v239 = vsel %vm237, %v236, 0
        %vm241 = vcmask 1043456
        %v242 = vsel %vm241, %v227, 0
        %244 = vmatprep.subr.mxu0 0.0
        %v245 = vand.u32 %v242, 4294901760
        %246 = vmatpush1.msra.mxu0 %v245
        %247 = vmatprep.subr.mxu0 0.0
        %248 = vmatpush1.msra.mxu0 0.0
        %249 = vmatprep.subr.mxu0 0.0
        %250 = vmatpush1.msra.mxu0 0.0
        %251 = vmatprep.subr.mxu0 0.0
        %252 = vmatpush1.msra.mxu0 0.0
        %253 = vmatprep.subr.mxu0 0.0
        %254 = vmatpush1.msra.mxu0 0.0
        %255 = vmatprep.subr.mxu0 0.0
        %256 = vmatpush1.msra.mxu0 0.0
        %257 = vmatprep.subr.mxu0 0.0
        %258 = vmatpush1.msra.mxu0 0.0
        %259 = vmatprep.subr.mxu0 0.0
        %260 = vmatpush1.msra.mxu0 0.0
        %261 = vmatprep.subr.mxu0 0.0
        %262 = vmatpush1.msra.mxu0 0.0
        %263 = vmatprep.subr.mxu0 0.0
        %264 = vmatpush1.msra.mxu0 0.0
        %265 = vmatprep.subr.mxu0 0.0
        %266 = vmatpush1.msra.mxu0 0.0
        %267 = vmatprep.subr.mxu0 0.0
        %268 = vmatpush1.msra.mxu0 0.0
        %269 = vmatprep.subr.mxu0 0.0
        %270 = vmatpush1.msra.mxu0 0.0
        %271 = vmatprep.subr.mxu0 0.0
        %272 = vmatpush1.msra.mxu0 0.0
        %273 = vmatprep.subr.mxu0 0.0
        %274 = vmatpush1.msra.mxu0 0.0
        %275 = vmatprep.subr.mxu0 0.0
        %276 = vmatpush1.msra.mxu0 0.0
        %277 = vmatprep.subr.mxu0 0.0
        %278 = vmatpush1.msra.mxu0 0.0
        %279 = vmatprep.subr.mxu0 0.0
        %280 = vmatpush1.msra.mxu0 0.0
        %281 = vmatprep.subr.mxu0 0.0
        %282 = vmatpush1.msra.mxu0 0.0
        %283 = vmatprep.subr.mxu0 0.0
        %284 = vmatpush1.msra.mxu0 0.0
        %285 = vmatprep.subr.mxu0 0.0
        %286 = vmatpush1.msra.mxu0 0.0
        %287 = vmatprep.subr.mxu0 0.0
        %288 = vmatpush1.msra.mxu0 0.0
        %289 = vmatprep.subr.mxu0 0.0
        %290 = vmatpush1.msra.mxu0 0.0
        %291 = vmatprep.subr.mxu0 0.0
        %292 = vmatpush1.msra.mxu0 0.0
        %293 = vmatprep.subr.mxu0 0.0
        %294 = vmatpush1.msra.mxu0 0.0
        %295 = vmatprep.subr.mxu0 0.0
        %296 = vmatpush1.msra.mxu0 0.0
        %297 = vmatprep.subr.mxu0 0.0
        %298 = vmatpush1.msra.mxu0 0.0
        %299 = vmatprep.subr.mxu0 0.0
        %300 = vmatpush1.msra.mxu0 0.0
        %301 = vmatprep.subr.mxu0 0.0
        %302 = vmatpush1.msra.mxu0 0.0
        %303 = vmatprep.subr.mxu0 0.0
        %304 = vmatpush1.msra.mxu0 0.0
        %305 = vmatprep.subr.mxu0 0.0
        %306 = vmatpush1.msra.mxu0 0.0
        %307 = vmatprep.subr.mxu0 0.0
        %308 = vmatpush1.msra.mxu0 0.0
        %309 = vmatprep.mubr.f32.mxu0 0.0
        %v310 = vand.u32 %v239, 4294901760
        %v311 = vsub.f32 %v239, %v310
        %v312 = vand.u32 %v311, 4294901760
        %v313 = vsub.f32 %v311, %v312
        %v314 = vand.u32 %v313, 4294901760
        %315 = vmatmul.mubr.f32.gmra.mrb[0].mxu0 %v314
        %v316 = vpop.f32.mrb[0].mxu0
        %v317 = vadd.f32 0.0, %v316
        %v318 = vpop.f32.mrb[0].mxu0
        %319 = vdwg.mxu0
        %320 = vmatprep.subr.mxu0 0.0
        %v321 = vand.u32 %v242, 4294901760
        %v322 = vsub.f32 %v242, %v321
        %v323 = vand.u32 %v322, 4294901760
        %v324 = vsub.f32 %v322, %v323
        %v325 = vand.u32 %v324, 4294901760
        %326 = vmatpush1.msra.mxu0 %v325
        %327 = vmatprep.subr.mxu0 0.0
        %328 = vmatpush1.msra.mxu0 0.0
        %329 = vmatprep.subr.mxu0 0.0
        %330 = vmatpush1.msra.mxu0 0.0
        %331 = vmatprep.subr.mxu0 0.0
        %332 = vmatpush1.msra.mxu0 0.0
        %333 = vmatprep.subr.mxu0 0.0
        %334 = vmatpush1.msra.mxu0 0.0
        %335 = vmatprep.subr.mxu0 0.0
        %336 = vmatpush1.msra.mxu0 0.0
        %337 = vmatprep.subr.mxu0 0.0
        %338 = vmatpush1.msra.mxu0 0.0
        %339 = vmatprep.subr.mxu0 0.0
        %340 = vmatpush1.msra.mxu0 0.0
        %341 = vmatprep.subr.mxu0 0.0
        %342 = vmatpush1.msra.mxu0 0.0
        %343 = vmatprep.subr.mxu0 0.0
        %344 = vmatpush1.msra.mxu0 0.0
        %345 = vmatprep.subr.mxu0 0.0
        %346 = vmatpush1.msra.mxu0 0.0
        %347 = vmatprep.subr.mxu0 0.0
        %348 = vmatpush1.msra.mxu0 0.0
        %349 = vmatprep.subr.mxu0 0.0
        %350 = vmatpush1.msra.mxu0 0.0
        %351 = vmatprep.subr.mxu0 0.0
        %352 = vmatpush1.msra.mxu0 0.0
        %353 = vmatprep.subr.mxu0 0.0
        %354 = vmatpush1.msra.mxu0 0.0
        %355 = vmatprep.subr.mxu0 0.0
        %356 = vmatpush1.msra.mxu0 0.0
        %357 = vmatprep.subr.mxu0 0.0
        %358 = vmatpush1.msra.mxu0 0.0
        %359 = vmatprep.subr.mxu0 0.0
        %360 = vmatpush1.msra.mxu0 0.0
        %361 = vmatprep.subr.mxu0 0.0
        %362 = vmatpush1.msra.mxu0 0.0
        %363 = vmatprep.subr.mxu0 0.0
        %364 = vmatpush1.msra.mxu0 0.0
        %365 = vmatprep.subr.mxu0 0.0
        %366 = vmatpush1.msra.mxu0 0.0
        %367 = vmatprep.subr.mxu0 0.0
        %368 = vmatpush1.msra.mxu0 0.0
        %369 = vmatprep.subr.mxu0 0.0
        %370 = vmatpush1.msra.mxu0 0.0
        %371 = vmatprep.subr.mxu0 0.0
        %372 = vmatpush1.msra.mxu0 0.0
        %373 = vmatprep.subr.mxu0 0.0
        %374 = vmatpush1.msra.mxu0 0.0
        %375 = vmatprep.subr.mxu0 0.0
        %376 = vmatpush1.msra.mxu0 0.0
        %377 = vmatprep.subr.mxu0 0.0
        %378 = vmatpush1.msra.mxu0 0.0
        %379 = vmatprep.subr.mxu0 0.0
        %380 = vmatpush1.msra.mxu0 0.0
        %381 = vmatprep.subr.mxu0 0.0
        %382 = vmatpush1.msra.mxu0 0.0
        %383 = vmatprep.subr.mxu0 0.0
        %384 = vmatpush1.msra.mxu0 0.0
        %385 = vmatprep.subr.mxu0 0.0
        %386 = vmatpush1.msra.mxu0 0.0
        %387 = vmatprep.subr.mxu0 0.0
        %388 = vmatpush1.msra.mxu0 0.0
        %389 = vmatprep.mubr.f32.mxu0 0.0
        %v390 = vand.u32 %v239, 4294901760
        %391 = vmatmul.mubr.f32.gmra.mrb[0].mxu0 %v390
        %v392 = vpop.f32.mrb[0].mxu0
        %v393 = vadd.f32 %v317, %v392
        %v394 = vpop.f32.mrb[0].mxu0
        %395 = vdwg.mxu0
        %396 = vmatprep.subr.mxu0 0.0
        %v397 = vand.u32 %v242, 4294901760
        %v398 = vsub.f32 %v242, %v397
        %399 = vmatpush1.msra.mxu0 %v398
        %400 = vmatprep.subr.mxu0 0.0
        %401 = vmatpush1.msra.mxu0 0.0
        %402 = vmatprep.subr.mxu0 0.0
        %403 = vmatpush1.msra.mxu0 0.0
        %404 = vmatprep.subr.mxu0 0.0
        %405 = vmatpush1.msra.mxu0 0.0
        %406 = vmatprep.subr.mxu0 0.0
        %407 = vmatpush1.msra.mxu0 0.0
        %408 = vmatprep.subr.mxu0 0.0
        %409 = vmatpush1.msra.mxu0 0.0
        %410 = vmatprep.subr.mxu0 0.0
        %411 = vmatpush1.msra.mxu0 0.0
        %412 = vmatprep.subr.mxu0 0.0
        %413 = vmatpush1.msra.mxu0 0.0
        %414 = vmatprep.subr.mxu0 0.0
        %415 = vmatpush1.msra.mxu0 0.0
        %416 = vmatprep.subr.mxu0 0.0
        %417 = vmatpush1.msra.mxu0 0.0
        %418 = vmatprep.subr.mxu0 0.0
        %419 = vmatpush1.msra.mxu0 0.0
        %420 = vmatprep.subr.mxu0 0.0
        %421 = vmatpush1.msra.mxu0 0.0
        %422 = vmatprep.subr.mxu0 0.0
        %423 = vmatpush1.msra.mxu0 0.0
        %424 = vmatprep.subr.mxu0 0.0
        %425 = vmatpush1.msra.mxu0 0.0
        %426 = vmatprep.subr.mxu0 0.0
        %427 = vmatpush1.msra.mxu0 0.0
        %428 = vmatprep.subr.mxu0 0.0
        %429 = vmatpush1.msra.mxu0 0.0
        %430 = vmatprep.subr.mxu0 0.0
        %431 = vmatpush1.msra.mxu0 0.0
        %432 = vmatprep.subr.mxu0 0.0
        %433 = vmatpush1.msra.mxu0 0.0
        %434 = vmatprep.subr.mxu0 0.0
        %435 = vmatpush1.msra.mxu0 0.0
        %436 = vmatprep.subr.mxu0 0.0
        %437 = vmatpush1.msra.mxu0 0.0
        %438 = vmatprep.subr.mxu0 0.0
        %439 = vmatpush1.msra.mxu0 0.0
        %440 = vmatprep.subr.mxu0 0.0
        %441 = vmatpush1.msra.mxu0 0.0
        %442 = vmatprep.subr.mxu0 0.0
        %443 = vmatpush1.msra.mxu0 0.0
        %444 = vmatprep.subr.mxu0 0.0
        %445 = vmatpush1.msra.mxu0 0.0
        %446 = vmatprep.subr.mxu0 0.0
        %447 = vmatpush1.msra.mxu0 0.0
        %448 = vmatprep.subr.mxu0 0.0
        %449 = vmatpush1.msra.mxu0 0.0
        %450 = vmatprep.subr.mxu0 0.0
        %451 = vmatpush1.msra.mxu0 0.0
        %452 = vmatprep.subr.mxu0 0.0
        %453 = vmatpush1.msra.mxu0 0.0
        %454 = vmatprep.subr.mxu0 0.0
        %455 = vmatpush1.msra.mxu0 0.0
        %456 = vmatprep.subr.mxu0 0.0
        %457 = vmatpush1.msra.mxu0 0.0
        %458 = vmatprep.subr.mxu0 0.0
        %459 = vmatpush1.msra.mxu0 0.0
        %460 = vmatprep.subr.mxu0 0.0
        %461 = vmatpush1.msra.mxu0 0.0
        %462 = vmatprep.mubr.f32.mxu0 0.0
        %v463 = vand.u32 %v239, 4294901760
        %v464 = vsub.f32 %v239, %v463
        %465 = vmatmul.mubr.f32.gmra.mrb[0].mxu0 %v464
        %v466 = vpop.f32.mrb[0].mxu0
        %v467 = vadd.f32 %v393, %v466
        %v468 = vpop.f32.mrb[0].mxu0
        %469 = vdwg.mxu0
        %470 = vmatprep.subr.mxu0 0.0
        %v471 = vand.u32 %v242, 4294901760
        %472 = vmatpush1.msra.mxu0 %v471
        %473 = vmatprep.subr.mxu0 0.0
        %474 = vmatpush1.msra.mxu0 0.0
        %475 = vmatprep.subr.mxu0 0.0
        %476 = vmatpush1.msra.mxu0 0.0
        %477 = vmatprep.subr.mxu0 0.0
        %478 = vmatpush1.msra.mxu0 0.0
        %479 = vmatprep.subr.mxu0 0.0
        %480 = vmatpush1.msra.mxu0 0.0
        %481 = vmatprep.subr.mxu0 0.0
        %482 = vmatpush1.msra.mxu0 0.0
        %483 = vmatprep.subr.mxu0 0.0
        %484 = vmatpush1.msra.mxu0 0.0
        %485 = vmatprep.subr.mxu0 0.0
        %486 = vmatpush1.msra.mxu0 0.0
        %487 = vmatprep.subr.mxu0 0.0
        %488 = vmatpush1.msra.mxu0 0.0
        %489 = vmatprep.subr.mxu0 0.0
        %490 = vmatpush1.msra.mxu0 0.0
        %491 = vmatprep.subr.mxu0 0.0
        %492 = vmatpush1.msra.mxu0 0.0
        %493 = vmatprep.subr.mxu0 0.0
        %494 = vmatpush1.msra.mxu0 0.0
        %495 = vmatprep.subr.mxu0 0.0
        %496 = vmatpush1.msra.mxu0 0.0
        %497 = vmatprep.subr.mxu0 0.0
        %498 = vmatpush1.msra.mxu0 0.0
        %499 = vmatprep.subr.mxu0 0.0
        %500 = vmatpush1.msra.mxu0 0.0
        %501 = vmatprep.subr.mxu0 0.0
        %502 = vmatpush1.msra.mxu0 0.0
        %503 = vmatprep.subr.mxu0 0.0
        %504 = vmatpush1.msra.mxu0 0.0
        %505 = vmatprep.subr.mxu0 0.0
        %506 = vmatpush1.msra.mxu0 0.0
        %507 = vmatprep.subr.mxu0 0.0
        %508 = vmatpush1.msra.mxu0 0.0
        %509 = vmatprep.subr.mxu0 0.0
        %510 = vmatpush1.msra.mxu0 0.0
        %511 = vmatprep.subr.mxu0 0.0
        %512 = vmatpush1.msra.mxu0 0.0
        %513 = vmatprep.subr.mxu0 0.0
        %514 = vmatpush1.msra.mxu0 0.0
        %515 = vmatprep.subr.mxu0 0.0
        %516 = vmatpush1.msra.mxu0 0.0
        %517 = vmatprep.subr.mxu0 0.0
        %518 = vmatpush1.msra.mxu0 0.0
        %519 = vmatprep.subr.mxu0 0.0
        %520 = vmatpush1.msra.mxu0 0.0
        %521 = vmatprep.subr.mxu0 0.0
        %522 = vmatpush1.msra.mxu0 0.0
        %523 = vmatprep.subr.mxu0 0.0
        %524 = vmatpush1.msra.mxu0 0.0
        %525 = vmatprep.subr.mxu0 0.0
        %526 = vmatpush1.msra.mxu0 0.0
        %527 = vmatprep.subr.mxu0 0.0
        %528 = vmatpush1.msra.mxu0 0.0
        %529 = vmatprep.subr.mxu0 0.0
        %530 = vmatpush1.msra.mxu0 0.0
        %531 = vmatprep.subr.mxu0 0.0
        %532 = vmatpush1.msra.mxu0 0.0
        %533 = vmatprep.subr.mxu0 0.0
        %534 = vmatpush1.msra.mxu0 0.0
        %535 = vmatprep.mubr.f32.mxu0 0.0
        %v536 = vand.u32 %v239, 4294901760
        %v537 = vsub.f32 %v239, %v536
        %v538 = vand.u32 %v537, 4294901760
        %539 = vmatmul.mubr.f32.gmra.mrb[0].mxu0 %v538
        %v540 = vpop.f32.mrb[0].mxu0
        %v541 = vadd.f32 %v467, %v540
        %v542 = vpop.f32.mrb[0].mxu0
        %543 = vdwg.mxu0
        %544 = vmatprep.subr.mxu0 0.0
        %v545 = vand.u32 %v242, 4294901760
        %v546 = vsub.f32 %v242, %v545
        %v547 = vand.u32 %v546, 4294901760
        %548 = vmatpush1.msra.mxu0 %v547
        %549 = vmatprep.subr.mxu0 0.0
        %550 = vmatpush1.msra.mxu0 0.0
        %551 = vmatprep.subr.mxu0 0.0
        %552 = vmatpush1.msra.mxu0 0.0
        %553 = vmatprep.subr.mxu0 0.0
        %554 = vmatpush1.msra.mxu0 0.0
        %555 = vmatprep.subr.mxu0 0.0
        %556 = vmatpush1.msra.mxu0 0.0
        %557 = vmatprep.subr.mxu0 0.0
        %558 = vmatpush1.msra.mxu0 0.0
        %559 = vmatprep.subr.mxu0 0.0
        %560 = vmatpush1.msra.mxu0 0.0
        %561 = vmatprep.subr.mxu0 0.0
        %562 = vmatpush1.msra.mxu0 0.0
        %563 = vmatprep.subr.mxu0 0.0
        %564 = vmatpush1.msra.mxu0 0.0
        %565 = vmatprep.subr.mxu0 0.0
        %566 = vmatpush1.msra.mxu0 0.0
        %567 = vmatprep.subr.mxu0 0.0
        %568 = vmatpush1.msra.mxu0 0.0
        %569 = vmatprep.subr.mxu0 0.0
        %570 = vmatpush1.msra.mxu0 0.0
        %571 = vmatprep.subr.mxu0 0.0
        %572 = vmatpush1.msra.mxu0 0.0
        %573 = vmatprep.subr.mxu0 0.0
        %574 = vmatpush1.msra.mxu0 0.0
        %575 = vmatprep.subr.mxu0 0.0
        %576 = vmatpush1.msra.mxu0 0.0
        %577 = vmatprep.subr.mxu0 0.0
        %578 = vmatpush1.msra.mxu0 0.0
        %579 = vmatprep.subr.mxu0 0.0
        %580 = vmatpush1.msra.mxu0 0.0
        %581 = vmatprep.subr.mxu0 0.0
        %582 = vmatpush1.msra.mxu0 0.0
        %583 = vmatprep.subr.mxu0 0.0
        %584 = vmatpush1.msra.mxu0 0.0
        %585 = vmatprep.subr.mxu0 0.0
        %586 = vmatpush1.msra.mxu0 0.0
        %587 = vmatprep.subr.mxu0 0.0
        %588 = vmatpush1.msra.mxu0 0.0
        %589 = vmatprep.subr.mxu0 0.0
        %590 = vmatpush1.msra.mxu0 0.0
        %591 = vmatprep.subr.mxu0 0.0
        %592 = vmatpush1.msra.mxu0 0.0
        %593 = vmatprep.subr.mxu0 0.0
        %594 = vmatpush1.msra.mxu0 0.0
        %595 = vmatprep.subr.mxu0 0.0
        %596 = vmatpush1.msra.mxu0 0.0
        %597 = vmatprep.subr.mxu0 0.0
        %598 = vmatpush1.msra.mxu0 0.0
        %599 = vmatprep.subr.mxu0 0.0
        %600 = vmatpush1.msra.mxu0 0.0
        %601 = vmatprep.subr.mxu0 0.0
        %602 = vmatpush1.msra.mxu0 0.0
        %603 = vmatprep.subr.mxu0 0.0
        %604 = vmatpush1.msra.mxu0 0.0
        %605 = vmatprep.subr.mxu0 0.0
        %606 = vmatpush1.msra.mxu0 0.0
        %607 = vmatprep.subr.mxu0 0.0
        %608 = vmatpush1.msra.mxu0 0.0
        %609 = vmatprep.subr.mxu0 0.0
        %610 = vmatpush1.msra.mxu0 0.0
        %611 = vmatprep.mubr.f32.mxu0 0.0
        %v612 = vand.u32 %v239, 4294901760
        %613 = vmatmul.mubr.f32.gmra.mrb[0].mxu0 %v612
        %v614 = vpop.f32.mrb[0].mxu0
        %v615 = vadd.f32 %v541, %v614
        %v616 = vpop.f32.mrb[0].mxu0
        %617 = vdwg.mxu0
        %618 = vmatprep.subr.mxu0 0.0
        %v619 = vand.u32 %v242, 4294901760
        %620 = vmatpush1.msra.mxu0 %v619
        %621 = vmatprep.subr.mxu0 0.0
        %622 = vmatpush1.msra.mxu0 0.0
        %623 = vmatprep.subr.mxu0 0.0
        %624 = vmatpush1.msra.mxu0 0.0
        %625 = vmatprep.subr.mxu0 0.0
        %626 = vmatpush1.msra.mxu0 0.0
        %627 = vmatprep.subr.mxu0 0.0
        %628 = vmatpush1.msra.mxu0 0.0
        %629 = vmatprep.subr.mxu0 0.0
        %630 = vmatpush1.msra.mxu0 0.0
        %631 = vmatprep.subr.mxu0 0.0
        %632 = vmatpush1.msra.mxu0 0.0
        %633 = vmatprep.subr.mxu0 0.0
        %634 = vmatpush1.msra.mxu0 0.0
        %635 = vmatprep.subr.mxu0 0.0
        %636 = vmatpush1.msra.mxu0 0.0
        %637 = vmatprep.subr.mxu0 0.0
        %638 = vmatpush1.msra.mxu0 0.0
        %639 = vmatprep.subr.mxu0 0.0
        %640 = vmatpush1.msra.mxu0 0.0
        %641 = vmatprep.subr.mxu0 0.0
        %642 = vmatpush1.msra.mxu0 0.0
        %643 = vmatprep.subr.mxu0 0.0
        %644 = vmatpush1.msra.mxu0 0.0
        %645 = vmatprep.subr.mxu0 0.0
        %646 = vmatpush1.msra.mxu0 0.0
        %647 = vmatprep.subr.mxu0 0.0
        %648 = vmatpush1.msra.mxu0 0.0
        %649 = vmatprep.subr.mxu0 0.0
        %650 = vmatpush1.msra.mxu0 0.0
        %651 = vmatprep.subr.mxu0 0.0
        %652 = vmatpush1.msra.mxu0 0.0
        %653 = vmatprep.subr.mxu0 0.0
        %654 = vmatpush1.msra.mxu0 0.0
        %655 = vmatprep.subr.mxu0 0.0
        %656 = vmatpush1.msra.mxu0 0.0
        %657 = vmatprep.subr.mxu0 0.0
        %658 = vmatpush1.msra.mxu0 0.0
        %659 = vmatprep.subr.mxu0 0.0
        %660 = vmatpush1.msra.mxu0 0.0
        %661 = vmatprep.subr.mxu0 0.0
        %662 = vmatpush1.msra.mxu0 0.0
        %663 = vmatprep.subr.mxu0 0.0
        %664 = vmatpush1.msra.mxu0 0.0
        %665 = vmatprep.subr.mxu0 0.0
        %666 = vmatpush1.msra.mxu0 0.0
        %667 = vmatprep.subr.mxu0 0.0
        %668 = vmatpush1.msra.mxu0 0.0
        %669 = vmatprep.subr.mxu0 0.0
        %670 = vmatpush1.msra.mxu0 0.0
        %671 = vmatprep.subr.mxu0 0.0
        %672 = vmatpush1.msra.mxu0 0.0
        %673 = vmatprep.subr.mxu0 0.0
        %674 = vmatpush1.msra.mxu0 0.0
        %675 = vmatprep.subr.mxu0 0.0
        %676 = vmatpush1.msra.mxu0 0.0
        %677 = vmatprep.subr.mxu0 0.0
        %678 = vmatpush1.msra.mxu0 0.0
        %679 = vmatprep.subr.mxu0 0.0
        %680 = vmatpush1.msra.mxu0 0.0
        %681 = vmatprep.subr.mxu0 0.0
        %682 = vmatpush1.msra.mxu0 0.0
        %683 = vmatprep.mubr.f32.mxu0 0.0
        %v684 = vand.u32 %v239, 4294901760
        %685 = vmatmul.mubr.f32.gmra.mrb[0].mxu0 %v684
        %v686 = vpop.f32.mrb[0].mxu0
        %v687 = vadd.f32 %v615, %v686
        %v688 = vpop.f32.mrb[0].mxu0
        %689 = vdwg.mxu0
        %v691 = vsel %vm237, %v234, 0
        %v693 = vsel %vm241, %v224, 0
        %695 = vmatprep.subr.mxu0 0.0
        %v696 = vand.u32 %v693, 4294901760
        %697 = vmatpush1.msra.mxu0 %v696
        %698 = vmatprep.subr.mxu0 0.0
        %699 = vmatpush1.msra.mxu0 0.0
        %700 = vmatprep.subr.mxu0 0.0
        %701 = vmatpush1.msra.mxu0 0.0
        %702 = vmatprep.subr.mxu0 0.0
        %703 = vmatpush1.msra.mxu0 0.0
        %704 = vmatprep.subr.mxu0 0.0
        %705 = vmatpush1.msra.mxu0 0.0
        %706 = vmatprep.subr.mxu0 0.0
        %707 = vmatpush1.msra.mxu0 0.0
        %708 = vmatprep.subr.mxu0 0.0
        %709 = vmatpush1.msra.mxu0 0.0
        %710 = vmatprep.subr.mxu0 0.0
        %711 = vmatpush1.msra.mxu0 0.0
        %712 = vmatprep.subr.mxu0 0.0
        %713 = vmatpush1.msra.mxu0 0.0
        %714 = vmatprep.subr.mxu0 0.0
        %715 = vmatpush1.msra.mxu0 0.0
        %716 = vmatprep.subr.mxu0 0.0
        %717 = vmatpush1.msra.mxu0 0.0
        %718 = vmatprep.subr.mxu0 0.0
        %719 = vmatpush1.msra.mxu0 0.0
        %720 = vmatprep.subr.mxu0 0.0
        %721 = vmatpush1.msra.mxu0 0.0
        %722 = vmatprep.subr.mxu0 0.0
        %723 = vmatpush1.msra.mxu0 0.0
        %724 = vmatprep.subr.mxu0 0.0
        %725 = vmatpush1.msra.mxu0 0.0
        %726 = vmatprep.subr.mxu0 0.0
        %727 = vmatpush1.msra.mxu0 0.0
        %728 = vmatprep.subr.mxu0 0.0
        %729 = vmatpush1.msra.mxu0 0.0
        %730 = vmatprep.subr.mxu0 0.0
        %731 = vmatpush1.msra.mxu0 0.0
        %732 = vmatprep.subr.mxu0 0.0
        %733 = vmatpush1.msra.mxu0 0.0
        %734 = vmatprep.subr.mxu0 0.0
        %735 = vmatpush1.msra.mxu0 0.0
        %736 = vmatprep.subr.mxu0 0.0
        %737 = vmatpush1.msra.mxu0 0.0
        %738 = vmatprep.subr.mxu0 0.0
        %739 = vmatpush1.msra.mxu0 0.0
        %740 = vmatprep.subr.mxu0 0.0
        %741 = vmatpush1.msra.mxu0 0.0
        %742 = vmatprep.subr.mxu0 0.0
        %743 = vmatpush1.msra.mxu0 0.0
        %744 = vmatprep.subr.mxu0 0.0
        %745 = vmatpush1.msra.mxu0 0.0
        %746 = vmatprep.subr.mxu0 0.0
        %747 = vmatpush1.msra.mxu0 0.0
        %748 = vmatprep.subr.mxu0 0.0
        %749 = vmatpush1.msra.mxu0 0.0
        %750 = vmatprep.subr.mxu0 0.0
        %751 = vmatpush1.msra.mxu0 0.0
        %752 = vmatprep.subr.mxu0 0.0
        %753 = vmatpush1.msra.mxu0 0.0
        %754 = vmatprep.subr.mxu0 0.0
        %755 = vmatpush1.msra.mxu0 0.0
        %756 = vmatprep.subr.mxu0 0.0
        %757 = vmatpush1.msra.mxu0 0.0
        %758 = vmatprep.subr.mxu0 0.0
        %759 = vmatpush1.msra.mxu0 0.0
        %760 = vmatprep.mubr.f32.mxu0 0.0
        %v761 = vand.u32 %v691, 4294901760
        %v762 = vsub.f32 %v691, %v761
        %v763 = vand.u32 %v762, 4294901760
        %v764 = vsub.f32 %v762, %v763
        %v765 = vand.u32 %v764, 4294901760
        %766 = vmatmul.mubr.f32.gmra.mrb[0].mxu0 %v765
        %v767 = vpop.f32.mrb[0].mxu0
        %v768 = vadd.f32 %v687, %v767
        %v769 = vpop.f32.mrb[0].mxu0
        %770 = vdwg.mxu0
        %771 = vmatprep.subr.mxu0 0.0
        %v772 = vand.u32 %v693, 4294901760
        %v773 = vsub.f32 %v693, %v772
        %v774 = vand.u32 %v773, 4294901760
        %v775 = vsub.f32 %v773, %v774
        %v776 = vand.u32 %v775, 4294901760
        %777 = vmatpush1.msra.mxu0 %v776
        %778 = vmatprep.subr.mxu0 0.0
        %779 = vmatpush1.msra.mxu0 0.0
        %780 = vmatprep.subr.mxu0 0.0
        %781 = vmatpush1.msra.mxu0 0.0
        %782 = vmatprep.subr.mxu0 0.0
        %783 = vmatpush1.msra.mxu0 0.0
        %784 = vmatprep.subr.mxu0 0.0
        %785 = vmatpush1.msra.mxu0 0.0
        %786 = vmatprep.subr.mxu0 0.0
        %787 = vmatpush1.msra.mxu0 0.0
        %788 = vmatprep.subr.mxu0 0.0
        %789 = vmatpush1.msra.mxu0 0.0
        %790 = vmatprep.subr.mxu0 0.0
        %791 = vmatpush1.msra.mxu0 0.0
        %792 = vmatprep.subr.mxu0 0.0
        %793 = vmatpush1.msra.mxu0 0.0
        %794 = vmatprep.subr.mxu0 0.0
        %795 = vmatpush1.msra.mxu0 0.0
        %796 = vmatprep.subr.mxu0 0.0
        %797 = vmatpush1.msra.mxu0 0.0
        %798 = vmatprep.subr.mxu0 0.0
        %799 = vmatpush1.msra.mxu0 0.0
        %800 = vmatprep.subr.mxu0 0.0
        %801 = vmatpush1.msra.mxu0 0.0
        %802 = vmatprep.subr.mxu0 0.0
        %803 = vmatpush1.msra.mxu0 0.0
        %804 = vmatprep.subr.mxu0 0.0
        %805 = vmatpush1.msra.mxu0 0.0
        %806 = vmatprep.subr.mxu0 0.0
        %807 = vmatpush1.msra.mxu0 0.0
        %808 = vmatprep.subr.mxu0 0.0
        %809 = vmatpush1.msra.mxu0 0.0
        %810 = vmatprep.subr.mxu0 0.0
        %811 = vmatpush1.msra.mxu0 0.0
        %812 = vmatprep.subr.mxu0 0.0
        %813 = vmatpush1.msra.mxu0 0.0
        %814 = vmatprep.subr.mxu0 0.0
        %815 = vmatpush1.msra.mxu0 0.0
        %816 = vmatprep.subr.mxu0 0.0
        %817 = vmatpush1.msra.mxu0 0.0
        %818 = vmatprep.subr.mxu0 0.0
        %819 = vmatpush1.msra.mxu0 0.0
        %820 = vmatprep.subr.mxu0 0.0
        %821 = vmatpush1.msra.mxu0 0.0
        %822 = vmatprep.subr.mxu0 0.0
        %823 = vmatpush1.msra.mxu0 0.0
        %824 = vmatprep.subr.mxu0 0.0
        %825 = vmatpush1.msra.mxu0 0.0
        %826 = vmatprep.subr.mxu0 0.0
        %827 = vmatpush1.msra.mxu0 0.0
        %828 = vmatprep.subr.mxu0 0.0
        %829 = vmatpush1.msra.mxu0 0.0
        %830 = vmatprep.subr.mxu0 0.0
        %831 = vmatpush1.msra.mxu0 0.0
        %832 = vmatprep.subr.mxu0 0.0
        %833 = vmatpush1.msra.mxu0 0.0
        %834 = vmatprep.subr.mxu0 0.0
        %835 = vmatpush1.msra.mxu0 0.0
        %836 = vmatprep.subr.mxu0 0.0
        %837 = vmatpush1.msra.mxu0 0.0
        %838 = vmatprep.subr.mxu0 0.0
        %839 = vmatpush1.msra.mxu0 0.0
        %840 = vmatprep.mubr.f32.mxu0 0.0
        %v841 = vand.u32 %v691, 4294901760
        %842 = vmatmul.mubr.f32.gmra.mrb[0].mxu0 %v841
        %v843 = vpop.f32.mrb[0].mxu0
        %v844 = vadd.f32 %v768, %v843
        %v845 = vpop.f32.mrb[0].mxu0
        %846 = vdwg.mxu0
        %847 = vmatprep.subr.mxu0 0.0
        %v848 = vand.u32 %v693, 4294901760
        %v849 = vsub.f32 %v693, %v848
        %850 = vmatpush1.msra.mxu0 %v849
        %851 = vmatprep.subr.mxu0 0.0
        %852 = vmatpush1.msra.mxu0 0.0
        %853 = vmatprep.subr.mxu0 0.0
        %854 = vmatpush1.msra.mxu0 0.0
        %855 = vmatprep.subr.mxu0 0.0
        %856 = vmatpush1.msra.mxu0 0.0
        %857 = vmatprep.subr.mxu0 0.0
        %858 = vmatpush1.msra.mxu0 0.0
        %859 = vmatprep.subr.mxu0 0.0
        %860 = vmatpush1.msra.mxu0 0.0
        %861 = vmatprep.subr.mxu0 0.0
        %862 = vmatpush1.msra.mxu0 0.0
        %863 = vmatprep.subr.mxu0 0.0
        %864 = vmatpush1.msra.mxu0 0.0
        %865 = vmatprep.subr.mxu0 0.0
        %866 = vmatpush1.msra.mxu0 0.0
        %867 = vmatprep.subr.mxu0 0.0
        %868 = vmatpush1.msra.mxu0 0.0
        %869 = vmatprep.subr.mxu0 0.0
        %870 = vmatpush1.msra.mxu0 0.0
        %871 = vmatprep.subr.mxu0 0.0
        %872 = vmatpush1.msra.mxu0 0.0
        %873 = vmatprep.subr.mxu0 0.0
        %874 = vmatpush1.msra.mxu0 0.0
        %875 = vmatprep.subr.mxu0 0.0
        %876 = vmatpush1.msra.mxu0 0.0
        %877 = vmatprep.subr.mxu0 0.0
        %878 = vmatpush1.msra.mxu0 0.0
        %879 = vmatprep.subr.mxu0 0.0
        %880 = vmatpush1.msra.mxu0 0.0
        %881 = vmatprep.subr.mxu0 0.0
        %882 = vmatpush1.msra.mxu0 0.0
        %883 = vmatprep.subr.mxu0 0.0
        %884 = vmatpush1.msra.mxu0 0.0
        %885 = vmatprep.subr.mxu0 0.0
        %886 = vmatpush1.msra.mxu0 0.0
        %887 = vmatprep.subr.mxu0 0.0
        %888 = vmatpush1.msra.mxu0 0.0
        %889 = vmatprep.subr.mxu0 0.0
        %890 = vmatpush1.msra.mxu0 0.0
        %891 = vmatprep.subr.mxu0 0.0
        %892 = vmatpush1.msra.mxu0 0.0
        %893 = vmatprep.subr.mxu0 0.0
        %894 = vmatpush1.msra.mxu0 0.0
        %895 = vmatprep.subr.mxu0 0.0
        %896 = vmatpush1.msra.mxu0 0.0
        %897 = vmatprep.subr.mxu0 0.0
        %898 = vmatpush1.msra.mxu0 0.0
        %899 = vmatprep.subr.mxu0 0.0
        %900 = vmatpush1.msra.mxu0 0.0
        %901 = vmatprep.subr.mxu0 0.0
        %902 = vmatpush1.msra.mxu0 0.0
        %903 = vmatprep.subr.mxu0 0.0
        %904 = vmatpush1.msra.mxu0 0.0
        %905 = vmatprep.subr.mxu0 0.0
        %906 = vmatpush1.msra.mxu0 0.0
        %907 = vmatprep.subr.mxu0 0.0
        %908 = vmatpush1.msra.mxu0 0.0
        %909 = vmatprep.subr.mxu0 0.0
        %910 = vmatpush1.msra.mxu0 0.0
        %911 = vmatprep.subr.mxu0 0.0
        %912 = vmatpush1.msra.mxu0 0.0
        %913 = vmatprep.mubr.f32.mxu0 0.0
        %v914 = vand.u32 %v691, 4294901760
        %v915 = vsub.f32 %v691, %v914
        %916 = vmatmul.mubr.f32.gmra.mrb[0].mxu0 %v915
        %v917 = vpop.f32.mrb[0].mxu0
        %v918 = vadd.f32 %v844, %v917
        %v919 = vpop.f32.mrb[0].mxu0
        %920 = vdwg.mxu0
        %921 = vmatprep.subr.mxu0 0.0
        %v922 = vand.u32 %v693, 4294901760
        %923 = vmatpush1.msra.mxu0 %v922
        %924 = vmatprep.subr.mxu0 0.0
        %925 = vmatpush1.msra.mxu0 0.0
        %926 = vmatprep.subr.mxu0 0.0
        %927 = vmatpush1.msra.mxu0 0.0
        %928 = vmatprep.subr.mxu0 0.0
        %929 = vmatpush1.msra.mxu0 0.0
        %930 = vmatprep.subr.mxu0 0.0
        %931 = vmatpush1.msra.mxu0 0.0
        %932 = vmatprep.subr.mxu0 0.0
        %933 = vmatpush1.msra.mxu0 0.0
        %934 = vmatprep.subr.mxu0 0.0
        %935 = vmatpush1.msra.mxu0 0.0
        %936 = vmatprep.subr.mxu0 0.0
        %937 = vmatpush1.msra.mxu0 0.0
        %938 = vmatprep.subr.mxu0 0.0
        %939 = vmatpush1.msra.mxu0 0.0
        %940 = vmatprep.subr.mxu0 0.0
        %941 = vmatpush1.msra.mxu0 0.0
        %942 = vmatprep.subr.mxu0 0.0
        %943 = vmatpush1.msra.mxu0 0.0
        %944 = vmatprep.subr.mxu0 0.0
        %945 = vmatpush1.msra.mxu0 0.0
        %946 = vmatprep.subr.mxu0 0.0
        %947 = vmatpush1.msra.mxu0 0.0
        %948 = vmatprep.subr.mxu0 0.0
        %949 = vmatpush1.msra.mxu0 0.0
        %950 = vmatprep.subr.mxu0 0.0
        %951 = vmatpush1.msra.mxu0 0.0
        %952 = vmatprep.subr.mxu0 0.0
        %953 = vmatpush1.msra.mxu0 0.0
        %954 = vmatprep.subr.mxu0 0.0
        %955 = vmatpush1.msra.mxu0 0.0
        %956 = vmatprep.subr.mxu0 0.0
        %957 = vmatpush1.msra.mxu0 0.0
        %958 = vmatprep.subr.mxu0 0.0
        %959 = vmatpush1.msra.mxu0 0.0
        %960 = vmatprep.subr.mxu0 0.0
        %961 = vmatpush1.msra.mxu0 0.0
        %962 = vmatprep.subr.mxu0 0.0
        %963 = vmatpush1.msra.mxu0 0.0
        %964 = vmatprep.subr.mxu0 0.0
        %965 = vmatpush1.msra.mxu0 0.0
        %966 = vmatprep.subr.mxu0 0.0
        %967 = vmatpush1.msra.mxu0 0.0
        %968 = vmatprep.subr.mxu0 0.0
        %969 = vmatpush1.msra.mxu0 0.0
        %970 = vmatprep.subr.mxu0 0.0
        %971 = vmatpush1.msra.mxu0 0.0
        %972 = vmatprep.subr.mxu0 0.0
        %973 = vmatpush1.msra.mxu0 0.0
        %974 = vmatprep.subr.mxu0 0.0
        %975 = vmatpush1.msra.mxu0 0.0
        %976 = vmatprep.subr.mxu0 0.0
        %977 = vmatpush1.msra.mxu0 0.0
        %978 = vmatprep.subr.mxu0 0.0
        %979 = vmatpush1.msra.mxu0 0.0
        %980 = vmatprep.subr.mxu0 0.0
        %981 = vmatpush1.msra.mxu0 0.0
        %982 = vmatprep.subr.mxu0 0.0
        %983 = vmatpush1.msra.mxu0 0.0
        %984 = vmatprep.subr.mxu0 0.0
        %985 = vmatpush1.msra.mxu0 0.0
        %986 = vmatprep.mubr.f32.mxu0 0.0
        %v987 = vand.u32 %v691, 4294901760
        %v988 = vsub.f32 %v691, %v987
        %v989 = vand.u32 %v988, 4294901760
        %990 = vmatmul.mubr.f32.gmra.mrb[0].mxu0 %v989
        %v991 = vpop.f32.mrb[0].mxu0
        %v992 = vadd.f32 %v918, %v991
        %v993 = vpop.f32.mrb[0].mxu0
        %994 = vdwg.mxu0
        %995 = vmatprep.subr.mxu0 0.0
        %v996 = vand.u32 %v693, 4294901760
        %v997 = vsub.f32 %v693, %v996
        %v998 = vand.u32 %v997, 4294901760
        %999 = vmatpush1.msra.mxu0 %v998
        %1000 = vmatprep.subr.mxu0 0.0
        %1001 = vmatpush1.msra.mxu0 0.0
        %1002 = vmatprep.subr.mxu0 0.0
        %1003 = vmatpush1.msra.mxu0 0.0
        %1004 = vmatprep.subr.mxu0 0.0
        %1005 = vmatpush1.msra.mxu0 0.0
        %1006 = vmatprep.subr.mxu0 0.0
        %1007 = vmatpush1.msra.mxu0 0.0
        %1008 = vmatprep.subr.mxu0 0.0
        %1009 = vmatpush1.msra.mxu0 0.0
        %1010 = vmatprep.subr.mxu0 0.0
        %1011 = vmatpush1.msra.mxu0 0.0
        %1012 = vmatprep.subr.mxu0 0.0
        %1013 = vmatpush1.msra.mxu0 0.0
        %1014 = vmatprep.subr.mxu0 0.0
        %1015 = vmatpush1.msra.mxu0 0.0
        %1016 = vmatprep.subr.mxu0 0.0
        %1017 = vmatpush1.msra.mxu0 0.0
        %1018 = vmatprep.subr.mxu0 0.0
        %1019 = vmatpush1.msra.mxu0 0.0
        %1020 = vmatprep.subr.mxu0 0.0
        %1021 = vmatpush1.msra.mxu0 0.0
        %1022 = vmatprep.subr.mxu0 0.0
        %1023 = vmatpush1.msra.mxu0 0.0
        %1024 = vmatprep.subr.mxu0 0.0
        %1025 = vmatpush1.msra.mxu0 0.0
        %1026 = vmatprep.subr.mxu0 0.0
        %1027 = vmatpush1.msra.mxu0 0.0
        %1028 = vmatprep.subr.mxu0 0.0
        %1029 = vmatpush1.msra.mxu0 0.0
        %1030 = vmatprep.subr.mxu0 0.0
        %1031 = vmatpush1.msra.mxu0 0.0
        %1032 = vmatprep.subr.mxu0 0.0
        %1033 = vmatpush1.msra.mxu0 0.0
        %1034 = vmatprep.subr.mxu0 0.0
        %1035 = vmatpush1.msra.mxu0 0.0
        %1036 = vmatprep.subr.mxu0 0.0
        %1037 = vmatpush1.msra.mxu0 0.0
        %1038 = vmatprep.subr.mxu0 0.0
        %1039 = vmatpush1.msra.mxu0 0.0
        %1040 = vmatprep.subr.mxu0 0.0
        %1041 = vmatpush1.msra.mxu0 0.0
        %1042 = vmatprep.subr.mxu0 0.0
        %1043 = vmatpush1.msra.mxu0 0.0
        %1044 = vmatprep.subr.mxu0 0.0
        %1045 = vmatpush1.msra.mxu0 0.0
        %1046 = vmatprep.subr.mxu0 0.0
        %1047 = vmatpush1.msra.mxu0 0.0
        %1048 = vmatprep.subr.mxu0 0.0
        %1049 = vmatpush1.msra.mxu0 0.0
        %1050 = vmatprep.subr.mxu0 0.0
        %1051 = vmatpush1.msra.mxu0 0.0
        %1052 = vmatprep.subr.mxu0 0.0
        %1053 = vmatpush1.msra.mxu0 0.0
        %1054 = vmatprep.subr.mxu0 0.0
        %1055 = vmatpush1.msra.mxu0 0.0
        %1056 = vmatprep.subr.mxu0 0.0
        %1057 = vmatpush1.msra.mxu0 0.0
        %1058 = vmatprep.subr.mxu0 0.0
        %1059 = vmatpush1.msra.mxu0 0.0
        %1060 = vmatprep.subr.mxu0 0.0
        %1061 = vmatpush1.msra.mxu0 0.0
        %1062 = vmatprep.mubr.f32.mxu0 0.0
        %v1063 = vand.u32 %v691, 4294901760
        %1064 = vmatmul.mubr.f32.gmra.mrb[0].mxu0 %v1063
        %v1065 = vpop.f32.mrb[0].mxu0
        %v1066 = vadd.f32 %v992, %v1065
        %v1067 = vpop.f32.mrb[0].mxu0
        %1068 = vdwg.mxu0
        %1069 = vmatprep.subr.mxu0 0.0
        %v1070 = vand.u32 %v693, 4294901760
        %1071 = vmatpush1.msra.mxu0 %v1070
        %1072 = vmatprep.subr.mxu0 0.0
        %1073 = vmatpush1.msra.mxu0 0.0
        %1074 = vmatprep.subr.mxu0 0.0
        %1075 = vmatpush1.msra.mxu0 0.0
        %1076 = vmatprep.subr.mxu0 0.0
        %1077 = vmatpush1.msra.mxu0 0.0
        %1078 = vmatprep.subr.mxu0 0.0
        %1079 = vmatpush1.msra.mxu0 0.0
        %1080 = vmatprep.subr.mxu0 0.0
        %1081 = vmatpush1.msra.mxu0 0.0
        %1082 = vmatprep.subr.mxu0 0.0
        %1083 = vmatpush1.msra.mxu0 0.0
        %1084 = vmatprep.subr.mxu0 0.0
        %1085 = vmatpush1.msra.mxu0 0.0
        %1086 = vmatprep.subr.mxu0 0.0
        %1087 = vmatpush1.msra.mxu0 0.0
        %1088 = vmatprep.subr.mxu0 0.0
        %1089 = vmatpush1.msra.mxu0 0.0
        %1090 = vmatprep.subr.mxu0 0.0
        %1091 = vmatpush1.msra.mxu0 0.0
        %1092 = vmatprep.subr.mxu0 0.0
        %1093 = vmatpush1.msra.mxu0 0.0
        %1094 = vmatprep.subr.mxu0 0.0
        %1095 = vmatpush1.msra.mxu0 0.0
        %1096 = vmatprep.subr.mxu0 0.0
        %1097 = vmatpush1.msra.mxu0 0.0
        %1098 = vmatprep.subr.mxu0 0.0
        %1099 = vmatpush1.msra.mxu0 0.0
        %1100 = vmatprep.subr.mxu0 0.0
        %1101 = vmatpush1.msra.mxu0 0.0
        %1102 = vmatprep.subr.mxu0 0.0
        %1103 = vmatpush1.msra.mxu0 0.0
        %1104 = vmatprep.subr.mxu0 0.0
        %1105 = vmatpush1.msra.mxu0 0.0
        %1106 = vmatprep.subr.mxu0 0.0
        %1107 = vmatpush1.msra.mxu0 0.0
        %1108 = vmatprep.subr.mxu0 0.0
        %1109 = vmatpush1.msra.mxu0 0.0
        %1110 = vmatprep.subr.mxu0 0.0
        %1111 = vmatpush1.msra.mxu0 0.0
        %1112 = vmatprep.subr.mxu0 0.0
        %1113 = vmatpush1.msra.mxu0 0.0
        %1114 = vmatprep.subr.mxu0 0.0
        %1115 = vmatpush1.msra.mxu0 0.0
        %1116 = vmatprep.subr.mxu0 0.0
        %1117 = vmatpush1.msra.mxu0 0.0
        %1118 = vmatprep.subr.mxu0 0.0
        %1119 = vmatpush1.msra.mxu0 0.0
        %1120 = vmatprep.subr.mxu0 0.0
        %1121 = vmatpush1.msra.mxu0 0.0
        %1122 = vmatprep.subr.mxu0 0.0
        %1123 = vmatpush1.msra.mxu0 0.0
        %1124 = vmatprep.subr.mxu0 0.0
        %1125 = vmatpush1.msra.mxu0 0.0
        %1126 = vmatprep.subr.mxu0 0.0
        %1127 = vmatpush1.msra.mxu0 0.0
        %1128 = vmatprep.subr.mxu0 0.0
        %1129 = vmatpush1.msra.mxu0 0.0
        %1130 = vmatprep.subr.mxu0 0.0
        %1131 = vmatpush1.msra.mxu0 0.0
        %1132 = vmatprep.subr.mxu0 0.0
        %1133 = vmatpush1.msra.mxu0 0.0
        %1134 = vmatprep.mubr.f32.mxu0 0.0
        %v1135 = vand.u32 %v691, 4294901760
        %1136 = vmatmul.mubr.f32.gmra.mrb[0].mxu0 %v1135
        %v1137 = vpop.f32.mrb[0].mxu0
        %v1138 = vadd.f32 %v1066, %v1137
        %v1139 = vpop.f32.mrb[0].mxu0
        %1140 = vdwg.mxu0
        %v1141 = vld [vmem:[#allocation6] sm:$0xf]
        %v1143 = vsel %vm237, %v1141, 0
        %v1146 = vsel %vm241, %v232, 0
        %1148 = vmatprep.subr.mxu0 0.0
        %v1149 = vand.u32 %v1146, 4294901760
        %1150 = vmatpush1.msra.mxu0 %v1149
        %1151 = vmatprep.subr.mxu0 0.0
        %1152 = vmatpush1.msra.mxu0 0.0
        %1153 = vmatprep.subr.mxu0 0.0
        %1154 = vmatpush1.msra.mxu0 0.0
        %1155 = vmatprep.subr.mxu0 0.0
        %1156 = vmatpush1.msra.mxu0 0.0
        %1157 = vmatprep.subr.mxu0 0.0
        %1158 = vmatpush1.msra.mxu0 0.0
        %1159 = vmatprep.subr.mxu0 0.0
        %1160 = vmatpush1.msra.mxu0 0.0
        %1161 = vmatprep.subr.mxu0 0.0
        %1162 = vmatpush1.msra.mxu0 0.0
        %1163 = vmatprep.subr.mxu0 0.0
        %1164 = vmatpush1.msra.mxu0 0.0
        %1165 = vmatprep.subr.mxu0 0.0
        %1166 = vmatpush1.msra.mxu0 0.0
        %1167 = vmatprep.subr.mxu0 0.0
        %1168 = vmatpush1.msra.mxu0 0.0
        %1169 = vmatprep.subr.mxu0 0.0
        %1170 = vmatpush1.msra.mxu0 0.0
        %1171 = vmatprep.subr.mxu0 0.0
        %1172 = vmatpush1.msra.mxu0 0.0
        %1173 = vmatprep.subr.mxu0 0.0
        %1174 = vmatpush1.msra.mxu0 0.0
        %1175 = vmatprep.subr.mxu0 0.0
        %1176 = vmatpush1.msra.mxu0 0.0
        %1177 = vmatprep.subr.mxu0 0.0
        %1178 = vmatpush1.msra.mxu0 0.0
        %1179 = vmatprep.subr.mxu0 0.0
        %1180 = vmatpush1.msra.mxu0 0.0
        %1181 = vmatprep.subr.mxu0 0.0
        %1182 = vmatpush1.msra.mxu0 0.0
        %1183 = vmatprep.subr.mxu0 0.0
        %1184 = vmatpush1.msra.mxu0 0.0
        %1185 = vmatprep.subr.mxu0 0.0
        %1186 = vmatpush1.msra.mxu0 0.0
        %1187 = vmatprep.subr.mxu0 0.0
        %1188 = vmatpush1.msra.mxu0 0.0
        %1189 = vmatprep.subr.mxu0 0.0
        %1190 = vmatpush1.msra.mxu0 0.0
        %1191 = vmatprep.subr.mxu0 0.0
        %1192 = vmatpush1.msra.mxu0 0.0
        %1193 = vmatprep.subr.mxu0 0.0
        %1194 = vmatpush1.msra.mxu0 0.0
        %1195 = vmatprep.subr.mxu0 0.0
        %1196 = vmatpush1.msra.mxu0 0.0
        %1197 = vmatprep.subr.mxu0 0.0
        %1198 = vmatpush1.msra.mxu0 0.0
        %1199 = vmatprep.subr.mxu0 0.0
        %1200 = vmatpush1.msra.mxu0 0.0
        %1201 = vmatprep.subr.mxu0 0.0
        %1202 = vmatpush1.msra.mxu0 0.0
        %1203 = vmatprep.subr.mxu0 0.0
        %1204 = vmatpush1.msra.mxu0 0.0
        %1205 = vmatprep.subr.mxu0 0.0
        %1206 = vmatpush1.msra.mxu0 0.0
        %1207 = vmatprep.subr.mxu0 0.0
        %1208 = vmatpush1.msra.mxu0 0.0
        %1209 = vmatprep.subr.mxu0 0.0
        %1210 = vmatpush1.msra.mxu0 0.0
        %1211 = vmatprep.subr.mxu0 0.0
        %1212 = vmatpush1.msra.mxu0 0.0
        %1213 = vmatprep.mubr.f32.mxu0 0.0
        %v1214 = vand.u32 %v1143, 4294901760
        %v1215 = vsub.f32 %v1143, %v1214
        %v1216 = vand.u32 %v1215, 4294901760
        %v1217 = vsub.f32 %v1215, %v1216
        %v1218 = vand.u32 %v1217, 4294901760
        %1219 = vmatmul.mubr.f32.gmra.mrb[0].mxu0 %v1218
        %v1220 = vpop.f32.mrb[0].mxu0
        %v1221 = vadd.f32 0.0, %v1220
        %v1222 = vpop.f32.mrb[0].mxu0
        %1223 = vdwg.mxu0
        %1224 = vmatprep.subr.mxu0 0.0
        %v1225 = vand.u32 %v1146, 4294901760
        %v1226 = vsub.f32 %v1146, %v1225
        %v1227 = vand.u32 %v1226, 4294901760
        %v1228 = vsub.f32 %v1226, %v1227
        %v1229 = vand.u32 %v1228, 4294901760
        %1230 = vmatpush1.msra.mxu0 %v1229
        %1231 = vmatprep.subr.mxu0 0.0
        %1232 = vmatpush1.msra.mxu0 0.0
        %1233 = vmatprep.subr.mxu0 0.0
        %1234 = vmatpush1.msra.mxu0 0.0
        %1235 = vmatprep.subr.mxu0 0.0
        %1236 = vmatpush1.msra.mxu0 0.0
        %1237 = vmatprep.subr.mxu0 0.0
        %1238 = vmatpush1.msra.mxu0 0.0
        %1239 = vmatprep.subr.mxu0 0.0
        %1240 = vmatpush1.msra.mxu0 0.0
        %1241 = vmatprep.subr.mxu0 0.0
        %1242 = vmatpush1.msra.mxu0 0.0
        %1243 = vmatprep.subr.mxu0 0.0
        %1244 = vmatpush1.msra.mxu0 0.0
        %1245 = vmatprep.subr.mxu0 0.0
        %1246 = vmatpush1.msra.mxu0 0.0
        %1247 = vmatprep.subr.mxu0 0.0
        %1248 = vmatpush1.msra.mxu0 0.0
        %1249 = vmatprep.subr.mxu0 0.0
        %1250 = vmatpush1.msra.mxu0 0.0
        %1251 = vmatprep.subr.mxu0 0.0
        %1252 = vmatpush1.msra.mxu0 0.0
        %1253 = vmatprep.subr.mxu0 0.0
        %1254 = vmatpush1.msra.mxu0 0.0
        %1255 = vmatprep.subr.mxu0 0.0
        %1256 = vmatpush1.msra.mxu0 0.0
        %1257 = vmatprep.subr.mxu0 0.0
        %1258 = vmatpush1.msra.mxu0 0.0
        %1259 = vmatprep.subr.mxu0 0.0
        %1260 = vmatpush1.msra.mxu0 0.0
        %1261 = vmatprep.subr.mxu0 0.0
        %1262 = vmatpush1.msra.mxu0 0.0
        %1263 = vmatprep.subr.mxu0 0.0
        %1264 = vmatpush1.msra.mxu0 0.0
        %1265 = vmatprep.subr.mxu0 0.0
        %1266 = vmatpush1.msra.mxu0 0.0
        %1267 = vmatprep.subr.mxu0 0.0
        %1268 = vmatpush1.msra.mxu0 0.0
        %1269 = vmatprep.subr.mxu0 0.0
        %1270 = vmatpush1.msra.mxu0 0.0
        %1271 = vmatprep.subr.mxu0 0.0
        %1272 = vmatpush1.msra.mxu0 0.0
        %1273 = vmatprep.subr.mxu0 0.0
        %1274 = vmatpush1.msra.mxu0 0.0
        %1275 = vmatprep.subr.mxu0 0.0
        %1276 = vmatpush1.msra.mxu0 0.0
        %1277 = vmatprep.subr.mxu0 0.0
        %1278 = vmatpush1.msra.mxu0 0.0
        %1279 = vmatprep.subr.mxu0 0.0
        %1280 = vmatpush1.msra.mxu0 0.0
        %1281 = vmatprep.subr.mxu0 0.0
        %1282 = vmatpush1.msra.mxu0 0.0
        %1283 = vmatprep.subr.mxu0 0.0
        %1284 = vmatpush1.msra.mxu0 0.0
        %1285 = vmatprep.subr.mxu0 0.0
        %1286 = vmatpush1.msra.mxu0 0.0
        %1287 = vmatprep.subr.mxu0 0.0
        %1288 = vmatpush1.msra.mxu0 0.0
        %1289 = vmatprep.subr.mxu0 0.0
        %1290 = vmatpush1.msra.mxu0 0.0
        %1291 = vmatprep.subr.mxu0 0.0
        %1292 = vmatpush1.msra.mxu0 0.0
        %1293 = vmatprep.mubr.f32.mxu0 0.0
        %v1294 = vand.u32 %v1143, 4294901760
        %1295 = vmatmul.mubr.f32.gmra.mrb[0].mxu0 %v1294
        %v1296 = vpop.f32.mrb[0].mxu0
        %v1297 = vadd.f32 %v1221, %v1296
        %v1298 = vpop.f32.mrb[0].mxu0
        %1299 = vdwg.mxu0
        %1300 = vmatprep.subr.mxu0 0.0
        %v1301 = vand.u32 %v1146, 4294901760
        %v1302 = vsub.f32 %v1146, %v1301
        %1303 = vmatpush1.msra.mxu0 %v1302
        %1304 = vmatprep.subr.mxu0 0.0
        %1305 = vmatpush1.msra.mxu0 0.0
        %1306 = vmatprep.subr.mxu0 0.0
        %1307 = vmatpush1.msra.mxu0 0.0
        %1308 = vmatprep.subr.mxu0 0.0
        %1309 = vmatpush1.msra.mxu0 0.0
        %1310 = vmatprep.subr.mxu0 0.0
        %1311 = vmatpush1.msra.mxu0 0.0
        %1312 = vmatprep.subr.mxu0 0.0
        %1313 = vmatpush1.msra.mxu0 0.0
        %1314 = vmatprep.subr.mxu0 0.0
        %1315 = vmatpush1.msra.mxu0 0.0
        %1316 = vmatprep.subr.mxu0 0.0
        %1317 = vmatpush1.msra.mxu0 0.0
        %1318 = vmatprep.subr.mxu0 0.0
        %1319 = vmatpush1.msra.mxu0 0.0
        %1320 = vmatprep.subr.mxu0 0.0
        %1321 = vmatpush1.msra.mxu0 0.0
        %1322 = vmatprep.subr.mxu0 0.0
        %1323 = vmatpush1.msra.mxu0 0.0
        %1324 = vmatprep.subr.mxu0 0.0
        %1325 = vmatpush1.msra.mxu0 0.0
        %1326 = vmatprep.subr.mxu0 0.0
        %1327 = vmatpush1.msra.mxu0 0.0
        %1328 = vmatprep.subr.mxu0 0.0
        %1329 = vmatpush1.msra.mxu0 0.0
        %1330 = vmatprep.subr.mxu0 0.0
        %1331 = vmatpush1.msra.mxu0 0.0
        %1332 = vmatprep.subr.mxu0 0.0
        %1333 = vmatpush1.msra.mxu0 0.0
        %1334 = vmatprep.subr.mxu0 0.0
        %1335 = vmatpush1.msra.mxu0 0.0
        %1336 = vmatprep.subr.mxu0 0.0
        %1337 = vmatpush1.msra.mxu0 0.0
        %1338 = vmatprep.subr.mxu0 0.0
        %1339 = vmatpush1.msra.mxu0 0.0
        %1340 = vmatprep.subr.mxu0 0.0
        %1341 = vmatpush1.msra.mxu0 0.0
        %1342 = vmatprep.subr.mxu0 0.0
        %1343 = vmatpush1.msra.mxu0 0.0
        %1344 = vmatprep.subr.mxu0 0.0
        %1345 = vmatpush1.msra.mxu0 0.0
        %1346 = vmatprep.subr.mxu0 0.0
        %1347 = vmatpush1.msra.mxu0 0.0
        %1348 = vmatprep.subr.mxu0 0.0
        %1349 = vmatpush1.msra.mxu0 0.0
        %1350 = vmatprep.subr.mxu0 0.0
        %1351 = vmatpush1.msra.mxu0 0.0
        %1352 = vmatprep.subr.mxu0 0.0
        %1353 = vmatpush1.msra.mxu0 0.0
        %1354 = vmatprep.subr.mxu0 0.0
        %1355 = vmatpush1.msra.mxu0 0.0
        %1356 = vmatprep.subr.mxu0 0.0
        %1357 = vmatpush1.msra.mxu0 0.0
        %1358 = vmatprep.subr.mxu0 0.0
        %1359 = vmatpush1.msra.mxu0 0.0
        %1360 = vmatprep.subr.mxu0 0.0
        %1361 = vmatpush1.msra.mxu0 0.0
        %1362 = vmatprep.subr.mxu0 0.0
        %1363 = vmatpush1.msra.mxu0 0.0
        %1364 = vmatprep.subr.mxu0 0.0
        %1365 = vmatpush1.msra.mxu0 0.0
        %1366 = vmatprep.mubr.f32.mxu0 0.0
        %v1367 = vand.u32 %v1143, 4294901760
        %v1368 = vsub.f32 %v1143, %v1367
        %1369 = vmatmul.mubr.f32.gmra.mrb[0].mxu0 %v1368
        %v1370 = vpop.f32.mrb[0].mxu0
        %v1371 = vadd.f32 %v1297, %v1370
        %v1372 = vpop.f32.mrb[0].mxu0
        %1373 = vdwg.mxu0
        %1374 = vmatprep.subr.mxu0 0.0
        %v1375 = vand.u32 %v1146, 4294901760
        %1376 = vmatpush1.msra.mxu0 %v1375
        %1377 = vmatprep.subr.mxu0 0.0
        %1378 = vmatpush1.msra.mxu0 0.0
        %1379 = vmatprep.subr.mxu0 0.0
        %1380 = vmatpush1.msra.mxu0 0.0
        %1381 = vmatprep.subr.mxu0 0.0
        %1382 = vmatpush1.msra.mxu0 0.0
        %1383 = vmatprep.subr.mxu0 0.0
        %1384 = vmatpush1.msra.mxu0 0.0
        %1385 = vmatprep.subr.mxu0 0.0
        %1386 = vmatpush1.msra.mxu0 0.0
        %1387 = vmatprep.subr.mxu0 0.0
        %1388 = vmatpush1.msra.mxu0 0.0
        %1389 = vmatprep.subr.mxu0 0.0
        %1390 = vmatpush1.msra.mxu0 0.0
        %1391 = vmatprep.subr.mxu0 0.0
        %1392 = vmatpush1.msra.mxu0 0.0
        %1393 = vmatprep.subr.mxu0 0.0
        %1394 = vmatpush1.msra.mxu0 0.0
        %1395 = vmatprep.subr.mxu0 0.0
        %1396 = vmatpush1.msra.mxu0 0.0
        %1397 = vmatprep.subr.mxu0 0.0
        %1398 = vmatpush1.msra.mxu0 0.0
        %1399 = vmatprep.subr.mxu0 0.0
        %1400 = vmatpush1.msra.mxu0 0.0
        %1401 = vmatprep.subr.mxu0 0.0
        %1402 = vmatpush1.msra.mxu0 0.0
        %1403 = vmatprep.subr.mxu0 0.0
        %1404 = vmatpush1.msra.mxu0 0.0
        %1405 = vmatprep.subr.mxu0 0.0
        %1406 = vmatpush1.msra.mxu0 0.0
        %1407 = vmatprep.subr.mxu0 0.0
        %1408 = vmatpush1.msra.mxu0 0.0
        %1409 = vmatprep.subr.mxu0 0.0
        %1410 = vmatpush1.msra.mxu0 0.0
        %1411 = vmatprep.subr.mxu0 0.0
        %1412 = vmatpush1.msra.mxu0 0.0
        %1413 = vmatprep.subr.mxu0 0.0
        %1414 = vmatpush1.msra.mxu0 0.0
        %1415 = vmatprep.subr.mxu0 0.0
        %1416 = vmatpush1.msra.mxu0 0.0
        %1417 = vmatprep.subr.mxu0 0.0
        %1418 = vmatpush1.msra.mxu0 0.0
        %1419 = vmatprep.subr.mxu0 0.0
        %1420 = vmatpush1.msra.mxu0 0.0
        %1421 = vmatprep.subr.mxu0 0.0
        %1422 = vmatpush1.msra.mxu0 0.0
        %1423 = vmatprep.subr.mxu0 0.0
        %1424 = vmatpush1.msra.mxu0 0.0
        %1425 = vmatprep.subr.mxu0 0.0
        %1426 = vmatpush1.msra.mxu0 0.0
        %1427 = vmatprep.subr.mxu0 0.0
        %1428 = vmatpush1.msra.mxu0 0.0
        %1429 = vmatprep.subr.mxu0 0.0
        %1430 = vmatpush1.msra.mxu0 0.0
        %1431 = vmatprep.subr.mxu0 0.0
        %1432 = vmatpush1.msra.mxu0 0.0
        %1433 = vmatprep.subr.mxu0 0.0
        %1434 = vmatpush1.msra.mxu0 0.0
        %1435 = vmatprep.subr.mxu0 0.0
        %1436 = vmatpush1.msra.mxu0 0.0
        %1437 = vmatprep.subr.mxu0 0.0
        %1438 = vmatpush1.msra.mxu0 0.0
        %1439 = vmatprep.mubr.f32.mxu0 0.0
        %v1440 = vand.u32 %v1143, 4294901760
        %v1441 = vsub.f32 %v1143, %v1440
        %v1442 = vand.u32 %v1441, 4294901760
        %1443 = vmatmul.mubr.f32.gmra.mrb[0].mxu0 %v1442
        %v1444 = vpop.f32.mrb[0].mxu0
        %v1445 = vadd.f32 %v1371, %v1444
        %v1446 = vpop.f32.mrb[0].mxu0
        %1447 = vdwg.mxu0
        %1448 = vmatprep.subr.mxu0 0.0
        %v1449 = vand.u32 %v1146, 4294901760
        %v1450 = vsub.f32 %v1146, %v1449
        %v1451 = vand.u32 %v1450, 4294901760
        %1452 = vmatpush1.msra.mxu0 %v1451
        %1453 = vmatprep.subr.mxu0 0.0
        %1454 = vmatpush1.msra.mxu0 0.0
        %1455 = vmatprep.subr.mxu0 0.0
        %1456 = vmatpush1.msra.mxu0 0.0
        %1457 = vmatprep.subr.mxu0 0.0
        %1458 = vmatpush1.msra.mxu0 0.0
        %1459 = vmatprep.subr.mxu0 0.0
        %1460 = vmatpush1.msra.mxu0 0.0
        %1461 = vmatprep.subr.mxu0 0.0
        %1462 = vmatpush1.msra.mxu0 0.0
        %1463 = vmatprep.subr.mxu0 0.0
        %1464 = vmatpush1.msra.mxu0 0.0
        %1465 = vmatprep.subr.mxu0 0.0
        %1466 = vmatpush1.msra.mxu0 0.0
        %1467 = vmatprep.subr.mxu0 0.0
        %1468 = vmatpush1.msra.mxu0 0.0
        %1469 = vmatprep.subr.mxu0 0.0
        %1470 = vmatpush1.msra.mxu0 0.0
        %1471 = vmatprep.subr.mxu0 0.0
        %1472 = vmatpush1.msra.mxu0 0.0
        %1473 = vmatprep.subr.mxu0 0.0
        %1474 = vmatpush1.msra.mxu0 0.0
        %1475 = vmatprep.subr.mxu0 0.0
        %1476 = vmatpush1.msra.mxu0 0.0
        %1477 = vmatprep.subr.mxu0 0.0
        %1478 = vmatpush1.msra.mxu0 0.0
        %1479 = vmatprep.subr.mxu0 0.0
        %1480 = vmatpush1.msra.mxu0 0.0
        %1481 = vmatprep.subr.mxu0 0.0
        %1482 = vmatpush1.msra.mxu0 0.0
        %1483 = vmatprep.subr.mxu0 0.0
        %1484 = vmatpush1.msra.mxu0 0.0
        %1485 = vmatprep.subr.mxu0 0.0
        %1486 = vmatpush1.msra.mxu0 0.0
        %1487 = vmatprep.subr.mxu0 0.0
        %1488 = vmatpush1.msra.mxu0 0.0
        %1489 = vmatprep.subr.mxu0 0.0
        %1490 = vmatpush1.msra.mxu0 0.0
        %1491 = vmatprep.subr.mxu0 0.0
        %1492 = vmatpush1.msra.mxu0 0.0
        %1493 = vmatprep.subr.mxu0 0.0
        %1494 = vmatpush1.msra.mxu0 0.0
        %1495 = vmatprep.subr.mxu0 0.0
        %1496 = vmatpush1.msra.mxu0 0.0
        %1497 = vmatprep.subr.mxu0 0.0
        %1498 = vmatpush1.msra.mxu0 0.0
        %1499 = vmatprep.subr.mxu0 0.0
        %1500 = vmatpush1.msra.mxu0 0.0
        %1501 = vmatprep.subr.mxu0 0.0
        %1502 = vmatpush1.msra.mxu0 0.0
        %1503 = vmatprep.subr.mxu0 0.0
        %1504 = vmatpush1.msra.mxu0 0.0
        %1505 = vmatprep.subr.mxu0 0.0
        %1506 = vmatpush1.msra.mxu0 0.0
        %1507 = vmatprep.subr.mxu0 0.0
        %1508 = vmatpush1.msra.mxu0 0.0
        %1509 = vmatprep.subr.mxu0 0.0
        %1510 = vmatpush1.msra.mxu0 0.0
        %1511 = vmatprep.subr.mxu0 0.0
        %1512 = vmatpush1.msra.mxu0 0.0
        %1513 = vmatprep.subr.mxu0 0.0
        %1514 = vmatpush1.msra.mxu0 0.0
        %1515 = vmatprep.mubr.f32.mxu0 0.0
        %v1516 = vand.u32 %v1143, 4294901760
        %1517 = vmatmul.mubr.f32.gmra.mrb[0].mxu0 %v1516
        %v1518 = vpop.f32.mrb[0].mxu0
        %v1519 = vadd.f32 %v1445, %v1518
        %v1520 = vpop.f32.mrb[0].mxu0
        %1521 = vdwg.mxu0
        %1522 = vmatprep.subr.mxu0 0.0
        %v1523 = vand.u32 %v1146, 4294901760
        %1524 = vmatpush1.msra.mxu0 %v1523
        %1525 = vmatprep.subr.mxu0 0.0
        %1526 = vmatpush1.msra.mxu0 0.0
        %1527 = vmatprep.subr.mxu0 0.0
        %1528 = vmatpush1.msra.mxu0 0.0
        %1529 = vmatprep.subr.mxu0 0.0
        %1530 = vmatpush1.msra.mxu0 0.0
        %1531 = vmatprep.subr.mxu0 0.0
        %1532 = vmatpush1.msra.mxu0 0.0
        %1533 = vmatprep.subr.mxu0 0.0
        %1534 = vmatpush1.msra.mxu0 0.0
        %1535 = vmatprep.subr.mxu0 0.0
        %1536 = vmatpush1.msra.mxu0 0.0
        %1537 = vmatprep.subr.mxu0 0.0
        %1538 = vmatpush1.msra.mxu0 0.0
        %1539 = vmatprep.subr.mxu0 0.0
        %1540 = vmatpush1.msra.mxu0 0.0
        %1541 = vmatprep.subr.mxu0 0.0
        %1542 = vmatpush1.msra.mxu0 0.0
        %1543 = vmatprep.subr.mxu0 0.0
        %1544 = vmatpush1.msra.mxu0 0.0
        %1545 = vmatprep.subr.mxu0 0.0
        %1546 = vmatpush1.msra.mxu0 0.0
        %1547 = vmatprep.subr.mxu0 0.0
        %1548 = vmatpush1.msra.mxu0 0.0
        %1549 = vmatprep.subr.mxu0 0.0
        %1550 = vmatpush1.msra.mxu0 0.0
        %1551 = vmatprep.subr.mxu0 0.0
        %1552 = vmatpush1.msra.mxu0 0.0
        %1553 = vmatprep.subr.mxu0 0.0
        %1554 = vmatpush1.msra.mxu0 0.0
        %1555 = vmatprep.subr.mxu0 0.0
        %1556 = vmatpush1.msra.mxu0 0.0
        %1557 = vmatprep.subr.mxu0 0.0
        %1558 = vmatpush1.msra.mxu0 0.0
        %1559 = vmatprep.subr.mxu0 0.0
        %1560 = vmatpush1.msra.mxu0 0.0
        %1561 = vmatprep.subr.mxu0 0.0
        %1562 = vmatpush1.msra.mxu0 0.0
        %1563 = vmatprep.subr.mxu0 0.0
        %1564 = vmatpush1.msra.mxu0 0.0
        %1565 = vmatprep.subr.mxu0 0.0
        %1566 = vmatpush1.msra.mxu0 0.0
        %1567 = vmatprep.subr.mxu0 0.0
        %1568 = vmatpush1.msra.mxu0 0.0
        %1569 = vmatprep.subr.mxu0 0.0
        %1570 = vmatpush1.msra.mxu0 0.0
        %1571 = vmatprep.subr.mxu0 0.0
        %1572 = vmatpush1.msra.mxu0 0.0
        %1573 = vmatprep.subr.mxu0 0.0
        %1574 = vmatpush1.msra.mxu0 0.0
        %1575 = vmatprep.subr.mxu0 0.0
        %1576 = vmatpush1.msra.mxu0 0.0
        %1577 = vmatprep.subr.mxu0 0.0
        %1578 = vmatpush1.msra.mxu0 0.0
        %1579 = vmatprep.subr.mxu0 0.0
        %1580 = vmatpush1.msra.mxu0 0.0
        %1581 = vmatprep.subr.mxu0 0.0
        %1582 = vmatpush1.msra.mxu0 0.0
        %1583 = vmatprep.subr.mxu0 0.0
        %1584 = vmatpush1.msra.mxu0 0.0
        %1585 = vmatprep.subr.mxu0 0.0
        %1586 = vmatpush1.msra.mxu0 0.0
        %1587 = vmatprep.mubr.f32.mxu0 0.0
        %v1588 = vand.u32 %v1143, 4294901760
        %1589 = vmatmul.mubr.f32.gmra.mrb[0].mxu0 %v1588
        %v1590 = vpop.f32.mrb[0].mxu0
        %v1591 = vadd.f32 %v1519, %v1590
        %v1592 = vpop.f32.mrb[0].mxu0
        %1593 = vdwg.mxu0
        %v1594 = vadd.f32 %v1138, %v1591
        %v1595 = vld [vmem:[%s2] sm:$0xf]
        %1597 = vset.pattern.permute.xlu0 0
        %1598 = vperm.xlu0 %1597, %v1595
        %v1599 = vpop.permute.xlu0 %1598
        %v1601 = vadd.f32 %v1594, %v1599
        %vm1602 = vcmask 60416
        %1603 = vst.msk [vmem:[%s217] sm:$0xf] %vm1602, %v1601
        %1604 = vrot.lane.b32.xlu0 %v224, 121
        %v1605 = vpop.permute.xlu0 %1604
        %vm1607 = vcmask 7172
        %1608 = vst.msk [vmem:[#allocation2 - $0x4] sm:$0xf0] %vm1607, %v1605
        %s1609 = sand.u32 %s113, 1
        %s1610 = scalar_lea.sflag [#allocation5], %s1609
        %s1611 = sand.u32 %s113, 1
        %s1612 = smul.addr %s1611, 4
        %s1613 = scalar_lea.vmem [#allocation8], %s1612
        // Predicated region
        $region45: #{tpu_custom_call.1} parent=31 // pred_check
          %p1614 = pneg %p123
        $region46: #{tpu_custom_call.1} parent=31 // pred_check_branch
          %1616 = sbr.rel (%p1614) target = $region48
        $region47: #{tpu_custom_call.1} parent=31 // pred_region
          %s1618 = ssub.s32 64, 64
          %1619 = vsyncadd %s1610, %s1618
          %s1620 = sadd.s32 %s26, %s25
          %s1621 = smul.addr %s1620, 64
          %s1622 = scalar_lea.hbm %s3, %s1621
          %s1624 = sshll.u32 %s1613, 4
          %s1625 = int_to_ptr.vmem [resolvable:$true] %s1624
          %1627 = dma.vmem_to_hbm [thread:$0]  %s1625, 64, %s1622, %s1610
        $region48: #{tpu_custom_call.1} parent=31 // pred_fallthru
          _
      $region32: #{tpu_custom_call.1} parent=5 // pred_fallthru
        _
      %p1628 = scmp.le.s32.totalorder 2, %s16
      // Predicated region
      $region49: #{tpu_custom_call.1} parent=5 // pred_check
        %p1629 = pneg %p1628
      $region50: #{tpu_custom_call.1} parent=5 // pred_check_branch
        %1631 = sbr.rel (%p1629) target = $region52
      $region51: #{tpu_custom_call.1} parent=5 // pred_region
        %s1632 = ssub.s32 %s16, 2
        // Predicated region
        $region53: #{tpu_custom_call.1} parent=51 // pred_check
          %p1633 = pneg %p129
        $region54: #{tpu_custom_call.1} parent=51 // pred_check_branch
          %1635 = sbr.rel (%p1633) target = $region56
        $region55: #{tpu_custom_call.1} parent=51 // pred_region
          %s1636 = sand.u32 %s114, 1
          %s1637 = scalar_lea.sflag [#allocation5], %s1636
          %s1638 = sand.u32 %s114, 1
          %s1639 = smul.addr %s1638, 4
          %s1640 = scalar_lea.vmem [#allocation8], %s1639
          %1641 = dma.done %s1637, 64
        $region56: #{tpu_custom_call.1} parent=51 // pred_fallthru
          _
      $region52: #{tpu_custom_call.1} parent=5 // pred_fallthru
        _
    $region6: #{tpu_custom_call.1} parent=1 // loop_footer
      %s20 = sadd.s32 1, %s16
    $region7: #{tpu_custom_call.1} parent=1 // loop_footer_branch
      %15 = sbr.rel target = $region3
    $region8: #{tpu_custom_call.1} parent=1 // loop_exit
      _
    %1642 = vsyncpa [#allocation4], 1
    %s1643 = scalar_lea.sflag [#allocation4], 1
    %1644 = vsyncpa %s1643, 1
    %1645 = vsyncpa [#allocation7], 1
    %1646 = vsyncpa [#allocation5], 1
    %s1647 = scalar_lea.sflag [#allocation5], 1
    %1648 = vsyncpa %s1647, 1

</llo_original>
